<compile_context>
chip_gen: v6e
topology: v6e:2x2x1
jax: 0.10.0
libtpu: 0.0.40
codegen_flags: <defaults>
</compile_context>

<pallas_src>
import functools

import jax
import jax.numpy as jnp
from jax.experimental import pallas as pl
from jax.experimental.pallas import tpu as pltpu


def _round_up(n, m):
    return ((n + m - 1) // m) * m


def _prediction_kernel(x_ref, es_ref, wH_ref, w01_ref, wfc2_ref, out_ref,
                       *, B, Bp, T, I, H, A):
    RI = _round_up(I, 8)
    RA = _round_up(A, 8)

    x = x_ref[...]          # (T*Bp, I) f32, time-major, batch padded to Bp
    es = es_ref[...]        # (B, A)    f32

    # Unpack the H-column weight/bias pack with static, sublane-aligned slices.
    o = 0
    w_x0 = wH_ref[o:o + I, :]; o += RI               # (I, H)  folded cross_feature ∘ W_ih0
    w_hh1 = wH_ref[o:o + H, :]; o += H               # (H, H)
    w_fc1h = wH_ref[o:o + H, :]; o += H              # (H, H)
    w_fc1e = wH_ref[o:o + A, :]; o += RA             # (A, H)
    bias = wH_ref[o:o + 8, :]                        # (8, H)
    b0 = bias[0:1, :]          # b_cf @ W_ih0 + b_ih0 + b_hh0
    b1 = bias[1:2, :]          # b_ih1 + b_hh1
    gamma = bias[2:3, :]
    beta = bias[3:4, :]
    b_fc1 = bias[4:5, :]

    w_h1 = w01_ref[...]                              # (H, 2H) = [W_hh0 | W_ih1]
    w_ih1 = w_h1[:, H:2 * H]                         # one-time slice for the epilogue

    # All non-recurrent layer-0 work hoisted out of the time loop: one batched matmul.
    g0 = jnp.dot(x, w_x0, preferred_element_type=jnp.float32) + b0      # (T*Bp, H)
    b1b = jnp.broadcast_to(b1, (Bp, H))                                  # hoisted

    # Skewed two-layer recurrence.  Iteration t produces h1[t] and h2[t-1]; both read
    # only h1[t-1] / h2[t-2], so the (Bp,2H) and (Bp,H) MXU pushes and the two tanh's
    # per step are independent and overlap -> critical path ~ 1 matmul + 1 tanh / step.
    h1 = jnp.tanh(g0[0:Bp, :])       # h1[0]   (h1[-1] == 0)
    h2 = None                        # h2[-1] == 0
    for t in range(1, T):
        r = jnp.dot(h1, w_h1, preferred_element_type=jnp.float32)       # (Bp, 2H)
        z = r[:, H:2 * H] + b1b
        if h2 is not None:
            z = z + jnp.dot(h2, w_hh1, preferred_element_type=jnp.float32)
        h2 = jnp.tanh(z)                                                 # h2[t-1]
        h1 = jnp.tanh(g0[t * Bp:(t + 1) * Bp, :] + r[:, 0:H])            # h1[t]
    # Epilogue: h2[T-1] from h1[T-1] and h2[T-2].
    z = jnp.dot(h1, w_ih1, preferred_element_type=jnp.float32) + b1b
    if h2 is not None:
        z = z + jnp.dot(h2, w_hh1, preferred_element_type=jnp.float32)
    h2 = jnp.tanh(z)

    # LayerNorm on the final hidden state (biased variance, eps = 1e-5).
    mean = jnp.mean(h2, axis=-1, keepdims=True)
    cen = h2 - mean
    var = jnp.mean(cen * cen, axis=-1, keepdims=True)
    hn = cen * jax.lax.rsqrt(var + 1e-5) * gamma + beta

    # TODO(synk): training-mode dropout (random mask) intentionally not applied (eval mode).

    # Head runs on the real B rows only; fc_1's cat([hn, enable_states]) is a
    # split-weight sum (no concat).
    hn_b = hn[0:B, :]
    a1 = jnp.maximum(
        jnp.dot(hn_b, w_fc1h, preferred_element_type=jnp.float32)
        + jnp.dot(es, w_fc1e, preferred_element_type=jnp.float32)
        + b_fc1,
        0.0,
    )

    w_fc2 = wfc2_ref[0:H, :]
    b_fc2 = wfc2_ref[H:H + 1, :]
    logits = jnp.dot(a1, w_fc2, preferred_element_type=jnp.float32) + b_fc2

    m = jnp.max(logits, axis=-1, keepdims=True)
    e = jnp.exp(logits - m)
    s = jnp.sum(e, axis=-1, keepdims=True)
    out_ref[...] = (e * pl.reciprocal(s, approx=False)).astype(out_ref.dtype)


def pack_params(params):
    """One-time, load-time parameter folding/packing (kept OFF the per-call path).

    All folds are algebraically exact; the matmul folds use HIGHEST precision so no
    bf16-pass rounding is baked into the packed weights.
    """
    hi = jax.lax.Precision.HIGHEST
    H = params["W_hh0"].shape[0]
    I = params["W_cf"].shape[0] // 2
    A = params["W_fc2"].shape[1]
    RI = _round_up(I, 8)
    RA = _round_up(A, 8)

    # cat([x, x]) @ W_cf == x @ (W_cf_top + W_cf_bot); compose with W_ih0.
    w_cf_fold = params["W_cf"][:I, :] + params["W_cf"][I:, :]            # (I, H)
    w_x0 = jnp.dot(w_cf_fold, params["W_ih0"], precision=hi)             # (I, H)
    b0 = (jnp.dot(params["b_cf"], params["W_ih0"], precision=hi)
          + params["b_ih0"] + params["b_hh0"])                           # (1, H)
    b1 = params["b_ih1"] + params["b_hh1"]                               # (1, H)

    w_fc1h = params["W_fc1"][:H, :]                                      # (H, H)
    w_fc1e = params["W_fc1"][H:, :]                                      # (A, H)

    def pad_rows(a, rows):
        return jnp.pad(a, ((0, rows - a.shape[0]), (0, 0)))

    bias_blk = jnp.concatenate(
        [b0, b1, params["ln_gamma"], params["ln_beta"], params["b_fc1"],
         jnp.zeros((3, H), jnp.float32)], axis=0)                        # (8, H)

    wpackH = jnp.concatenate(
        [pad_rows(w_x0, RI), params["W_hh1"], w_fc1h, pad_rows(w_fc1e, RA), bias_blk],
        axis=0)                                                          # (RI+2H+RA+8, H)

    # Recurrent weights that read h1[t-1], packed along N: one push feeds both chains.
    w_h1pack = jnp.concatenate([params["W_hh0"], params["W_ih1"]], axis=1)   # (H, 2H)

    wfc2 = pad_rows(jnp.concatenate([params["W_fc2"], params["b_fc2"]], axis=0),
                    H + 8)                                               # (H+8, A)

    packed = {"wpackH": wpackH, "w_h1pack": w_h1pack, "wfc2": wfc2}
    return jax.tree_util.tree_map(jax.block_until_ready, packed)


@jax.jit
def prediction_model_forward(x, enable_states, packed):
    """x: (B, T, I) f32, enable_states: (B, A) f32, packed: output of pack_params."""
    B, T, I = x.shape
    A = enable_states.shape[-1]
    H = packed["w_h1pack"].shape[0]
    Bp = _round_up(max(B, 8), 8)

    # Only per-call prep: pad batch to a sublane multiple and go time-major so every
    # per-step g0 slice inside the kernel is an aligned free view.
    x_tb = jnp.transpose(jnp.pad(x, ((0, Bp - B), (0, 0), (0, 0))), (1, 0, 2))
    x_tb = x_tb.reshape(T * Bp, I)

    vmem = pl.BlockSpec(memory_space=pltpu.MemorySpace.VMEM)
    kernel = functools.partial(_prediction_kernel, B=B, Bp=Bp, T=T, I=I, H=H, A=A)
    # TODO(synk): if production T*Bp*H ever grows toward tens of MiB (v7x has 64 MiB
    # VMEM), chunk the hoisted g0 projection over the time axis; at these shapes
    # everything is resident, so no grid/pipeline is used.
    return pl.pallas_call(
        kernel,
        out_shape=jax.ShapeDtypeStruct((B, A), jnp.float32),
        in_specs=[vmem, vmem, vmem, vmem, vmem],
        out_specs=vmem,
    )(x_tb, enable_states, packed["wpackH"], packed["w_h1pack"], packed["wfc2"])


def init_params(key, input_size, hidden_size, num_activities):
    """PyTorch-style uniform(-1/sqrt(fan_in), +1/sqrt(fan_in)) init.

    Weights stored as (in_features, out_features); biases as (1, out_features).
    """
    def uniform(k, shape, fan_in):
        bound = 1.0 / jnp.sqrt(jnp.float32(fan_in))
        return jax.random.uniform(k, shape, jnp.float32, -bound, bound)

    ks = jax.random.split(key, 16)
    I, H, A = input_size, hidden_size, num_activities
    return {
        "W_cf": uniform(ks[0], (2 * I, H), 2 * I),
        "b_cf": uniform(ks[1], (1, H), 2 * I),
        "W_ih0": uniform(ks[2], (H, H), H),
        "b_ih0": uniform(ks[3], (1, H), H),
        "W_hh0": uniform(ks[4], (H, H), H),
        "b_hh0": uniform(ks[5], (1, H), H),
        "W_ih1": uniform(ks[6], (H, H), H),
        "b_ih1": uniform(ks[7], (1, H), H),
        "W_hh1": uniform(ks[8], (H, H), H),
        "b_hh1": uniform(ks[9], (1, H), H),
        "ln_gamma": jnp.ones((1, H), jnp.float32),
        "ln_beta": jnp.zeros((1, H), jnp.float32),
        "W_fc1": uniform(ks[10], (H + A, H), H + A),
        "b_fc1": uniform(ks[11], (1, H), H + A),
        "W_fc2": uniform(ks[12], (H, A), H),
        "b_fc2": uniform(ks[13], (1, A), H),
    }


def reference_forward(x, es, p):
    """Pure-JAX reference mirroring the PyTorch forward (eval mode), unfolded weights,
    computed at HIGHEST matmul precision."""
    hi = jax.lax.Precision.HIGHEST
    B, T, I = x.shape
    H = p["W_cf"].shape[1]
    xx = jnp.concatenate([x, x], axis=-1)                                 # (B, T, 2I)
    feat = jnp.einsum("bti,ih->bth", xx, p["W_cf"], precision=hi) + p["b_cf"]
    h1 = jnp.zeros((B, H), jnp.float32)
    h2 = jnp.zeros((B, H), jnp.float32)
    for t in range(T):
        h1 = jnp.tanh(jnp.dot(feat[:, t, :], p["W_ih0"], precision=hi) + p["b_ih0"]
                      + jnp.dot(h1, p["W_hh0"], precision=hi) + p["b_hh0"])
        h2 = jnp.tanh(jnp.dot(h1, p["W_ih1"], precision=hi) + p["b_ih1"]
                      + jnp.dot(h2, p["W_hh1"], precision=hi) + p["b_hh1"])
    mean = jnp.mean(h2, axis=-1, keepdims=True)
    var = jnp.mean((h2 - mean) ** 2, axis=-1, keepdims=True)
    hn = (h2 - mean) / jnp.sqrt(var + 1e-5) * p["ln_gamma"] + p["ln_beta"]
    s2 = jnp.concatenate([hn, es], axis=-1)
    a1 = jnp.maximum(jnp.dot(s2, p["W_fc1"], precision=hi) + p["b_fc1"], 0.0)
    logits = jnp.dot(a1, p["W_fc2"], precision=hi) + p["b_fc2"]
    return jax.nn.softmax(logits, axis=-1)


if __name__ == "__main__":
    B, T = 2, 8
    input_size = 4
    hidden_size = 32
    num_activities = 6

    key = jax.random.PRNGKey(0)
    k_x, k_es, k_p = jax.random.split(key, 3)

    x = jax.random.normal(k_x, (B, T, input_size), jnp.float32)
    enable_states = jax.random.normal(k_es, (B, num_activities), jnp.float32)
    params = init_params(k_p, input_size, hidden_size, num_activities)

    # One-time load-time packing (off the per-call path).
    packed = pack_params(params)

    out = prediction_model_forward(x, enable_states, packed)
    out = jax.block_until_ready(out)

    ref = reference_forward(x, enable_states, params)

    assert out.shape == (B, num_activities)
    assert bool(jnp.all(jnp.isfinite(out)))
    assert bool(jnp.allclose(jnp.sum(out, axis=-1), 1.0, atol=1e-4))
    assert bool(jnp.allclose(out, ref, atol=1e-3, rtol=1e-3))

    print("KERNEL_OK")
</pallas_src>

<mosaic_0001>
module attributes {stable_mosaic.version = 11 : i64} {
  func.func @_prediction_kernel(%arg0: memref<64x4xf32, #tpu.memory_space<vmem>>, %arg1: memref<2x6xf32, #tpu.memory_space<vmem>>, %arg2: memref<88x32xf32, #tpu.memory_space<vmem>>, %arg3: memref<32x64xf32, #tpu.memory_space<vmem>>, %arg4: memref<40x6xf32, #tpu.memory_space<vmem>>, %arg5: memref<2x6xf32, #tpu.memory_space<vmem>>) attributes {dimension_semantics = [], scalar_prefetch = 0 : i64, scratch_operands = 0 : i64, tpu.core_type = #tpu.core_type<tc>} {
    %c0 = arith.constant 0 : index
    %c0_0 = arith.constant 0 : index
    %0 = vector.load %arg0[%c0, %c0_0] : memref<64x4xf32, #tpu.memory_space<vmem>>, vector<64x4xf32>
    %c0_1 = arith.constant 0 : index
    %c0_2 = arith.constant 0 : index
    %1 = vector.load %arg1[%c0_1, %c0_2] : memref<2x6xf32, #tpu.memory_space<vmem>>, vector<2x6xf32>
    %c0_3 = arith.constant 0 : index
    %c0_4 = arith.constant 0 : index
    %2 = vector.load %arg2[%c0_3, %c0_4] : memref<88x32xf32, #tpu.memory_space<vmem>>, vector<4x32xf32>
    %c8 = arith.constant 8 : index
    %c0_5 = arith.constant 0 : index
    %3 = vector.load %arg2[%c8, %c0_5] : memref<88x32xf32, #tpu.memory_space<vmem>>, vector<32x32xf32>
    %c40 = arith.constant 40 : index
    %c0_6 = arith.constant 0 : index
    %4 = vector.load %arg2[%c40, %c0_6] : memref<88x32xf32, #tpu.memory_space<vmem>>, vector<32x32xf32>
    %c72 = arith.constant 72 : index
    %c0_7 = arith.constant 0 : index
    %5 = vector.load %arg2[%c72, %c0_7] : memref<88x32xf32, #tpu.memory_space<vmem>>, vector<6x32xf32>
    %c80 = arith.constant 80 : index
    %c0_8 = arith.constant 0 : index
    %6 = vector.load %arg2[%c80, %c0_8] : memref<88x32xf32, #tpu.memory_space<vmem>>, vector<8x32xf32>
    %7 = vector.extract_strided_slice %6 {offsets = [0, 0], sizes = [1, 32], strides = [1, 1]} : vector<8x32xf32> to vector<1x32xf32>
    %8 = vector.extract_strided_slice %6 {offsets = [1, 0], sizes = [1, 32], strides = [1, 1]} : vector<8x32xf32> to vector<1x32xf32>
    %9 = vector.extract_strided_slice %6 {offsets = [2, 0], sizes = [1, 32], strides = [1, 1]} : vector<8x32xf32> to vector<1x32xf32>
    %10 = vector.extract_strided_slice %6 {offsets = [3, 0], sizes = [1, 32], strides = [1, 1]} : vector<8x32xf32> to vector<1x32xf32>
    %11 = vector.extract_strided_slice %6 {offsets = [4, 0], sizes = [1, 32], strides = [1, 1]} : vector<8x32xf32> to vector<1x32xf32>
    %c0_9 = arith.constant 0 : index
    %c0_10 = arith.constant 0 : index
    %12 = vector.load %arg3[%c0_9, %c0_10] : memref<32x64xf32, #tpu.memory_space<vmem>>, vector<32x64xf32>
    %13 = vector.extract_strided_slice %12 {offsets = [0, 32], sizes = [32, 32], strides = [1, 1]} : vector<32x64xf32> to vector<32x32xf32>
    %cst = arith.constant dense<0.000000e+00> : vector<64x32xf32>
    %14 = tpu.matmul %0, %2, %cst {dimension_numbers = #tpu.dot_dimension_numbers<[1], [0], [0], [1], [0, 0, 1, 1], [], []>} : vector<64x4xf32>, vector<4x32xf32>, vector<64x32xf32> -> vector<64x32xf32>
    %15 = vector.broadcast %7 : vector<1x32xf32> to vector<64x32xf32>
    %16 = arith.addf %14, %15 : vector<64x32xf32>
    %17 = vector.shape_cast %8 : vector<1x32xf32> to vector<1x32xf32>
    %18 = vector.broadcast %17 : vector<1x32xf32> to vector<8x32xf32>
    %19 = vector.extract_strided_slice %16 {offsets = [0, 0], sizes = [8, 32], strides = [1, 1]} : vector<64x32xf32> to vector<8x32xf32>
    %20 = math.tanh %19 : vector<8x32xf32>
    %cst_11 = arith.constant dense<0.000000e+00> : vector<8x64xf32>
    %21 = tpu.matmul %20, %12, %cst_11 {dimension_numbers = #tpu.dot_dimension_numbers<[1], [0], [0], [1], [0, 0, 1, 1], [], []>} : vector<8x32xf32>, vector<32x64xf32>, vector<8x64xf32> -> vector<8x64xf32>
    %22 = vector.extract_strided_slice %21 {offsets = [0, 32], sizes = [8, 32], strides = [1, 1]} : vector<8x64xf32> to vector<8x32xf32>
    %23 = arith.addf %22, %18 : vector<8x32xf32>
    %24 = math.tanh %23 : vector<8x32xf32>
    %25 = vector.extract_strided_slice %16 {offsets = [8, 0], sizes = [8, 32], strides = [1, 1]} : vector<64x32xf32> to vector<8x32xf32>
    %26 = vector.extract_strided_slice %21 {offsets = [0, 0], sizes = [8, 32], strides = [1, 1]} : vector<8x64xf32> to vector<8x32xf32>
    %27 = arith.addf %25, %26 : vector<8x32xf32>
    %28 = math.tanh %27 : vector<8x32xf32>
    %cst_12 = arith.constant dense<0.000000e+00> : vector<8x64xf32>
    %29 = tpu.matmul %28, %12, %cst_12 {dimension_numbers = #tpu.dot_dimension_numbers<[1], [0], [0], [1], [0, 0, 1, 1], [], []>} : vector<8x32xf32>, vector<32x64xf32>, vector<8x64xf32> -> vector<8x64xf32>
    %30 = vector.extract_strided_slice %29 {offsets = [0, 32], sizes = [8, 32], strides = [1, 1]} : vector<8x64xf32> to vector<8x32xf32>
    %31 = arith.addf %30, %18 : vector<8x32xf32>
    %cst_13 = arith.constant dense<0.000000e+00> : vector<8x32xf32>
    %32 = tpu.matmul %24, %3, %cst_13 {dimension_numbers = #tpu.dot_dimension_numbers<[1], [0], [0], [1], [0, 0, 1, 1], [], []>} : vector<8x32xf32>, vector<32x32xf32>, vector<8x32xf32> -> vector<8x32xf32>
    %33 = arith.addf %31, %32 : vector<8x32xf32>
    %34 = math.tanh %33 : vector<8x32xf32>
    %35 = vector.extract_strided_slice %16 {offsets = [16, 0], sizes = [8, 32], strides = [1, 1]} : vector<64x32xf32> to vector<8x32xf32>
    %36 = vector.extract_strided_slice %29 {offsets = [0, 0], sizes = [8, 32], strides = [1, 1]} : vector<8x64xf32> to vector<8x32xf32>
    %37 = arith.addf %35, %36 : vector<8x32xf32>
    %38 = math.tanh %37 : vector<8x32xf32>
    %cst_14 = arith.constant dense<0.000000e+00> : vector<8x64xf32>
    %39 = tpu.matmul %38, %12, %cst_14 {dimension_numbers = #tpu.dot_dimension_numbers<[1], [0], [0], [1], [0, 0, 1, 1], [], []>} : vector<8x32xf32>, vector<32x64xf32>, vector<8x64xf32> -> vector<8x64xf32>
    %40 = vector.extract_strided_slice %39 {offsets = [0, 32], sizes = [8, 32], strides = [1, 1]} : vector<8x64xf32> to vector<8x32xf32>
    %41 = arith.addf %40, %18 : vector<8x32xf32>
    %cst_15 = arith.constant dense<0.000000e+00> : vector<8x32xf32>
    %42 = tpu.matmul %34, %3, %cst_15 {dimension_numbers = #tpu.dot_dimension_numbers<[1], [0], [0], [1], [0, 0, 1, 1], [], []>} : vector<8x32xf32>, vector<32x32xf32>, vector<8x32xf32> -> vector<8x32xf32>
    %43 = arith.addf %41, %42 : vector<8x32xf32>
    %44 = math.tanh %43 : vector<8x32xf32>
    %45 = vector.extract_strided_slice %16 {offsets = [24, 0], sizes = [8, 32], strides = [1, 1]} : vector<64x32xf32> to vector<8x32xf32>
    %46 = vector.extract_strided_slice %39 {offsets = [0, 0], sizes = [8, 32], strides = [1, 1]} : vector<8x64xf32> to vector<8x32xf32>
    %47 = arith.addf %45, %46 : vector<8x32xf32>
    %48 = math.tanh %47 : vector<8x32xf32>
    %cst_16 = arith.constant dense<0.000000e+00> : vector<8x64xf32>
    %49 = tpu.matmul %48, %12, %cst_16 {dimension_numbers = #tpu.dot_dimension_numbers<[1], [0], [0], [1], [0, 0, 1, 1], [], []>} : vector<8x32xf32>, vector<32x64xf32>, vector<8x64xf32> -> vector<8x64xf32>
    %50 = vector.extract_strided_slice %49 {offsets = [0, 32], sizes = [8, 32], strides = [1, 1]} : vector<8x64xf32> to vector<8x32xf32>
    %51 = arith.addf %50, %18 : vector<8x32xf32>
    %cst_17 = arith.constant dense<0.000000e+00> : vector<8x32xf32>
    %52 = tpu.matmul %44, %3, %cst_17 {dimension_numbers = #tpu.dot_dimension_numbers<[1], [0], [0], [1], [0, 0, 1, 1], [], []>} : vector<8x32xf32>, vector<32x32xf32>, vector<8x32xf32> -> vector<8x32xf32>
    %53 = arith.addf %51, %52 : vector<8x32xf32>
    %54 = math.tanh %53 : vector<8x32xf32>
    %55 = vector.extract_strided_slice %16 {offsets = [32, 0], sizes = [8, 32], strides = [1, 1]} : vector<64x32xf32> to vector<8x32xf32>
    %56 = vector.extract_strided_slice %49 {offsets = [0, 0], sizes = [8, 32], strides = [1, 1]} : vector<8x64xf32> to vector<8x32xf32>
    %57 = arith.addf %55, %56 : vector<8x32xf32>
    %58 = math.tanh %57 : vector<8x32xf32>
    %cst_18 = arith.constant dense<0.000000e+00> : vector<8x64xf32>
    %59 = tpu.matmul %58, %12, %cst_18 {dimension_numbers = #tpu.dot_dimension_numbers<[1], [0], [0], [1], [0, 0, 1, 1], [], []>} : vector<8x32xf32>, vector<32x64xf32>, vector<8x64xf32> -> vector<8x64xf32>
    %60 = vector.extract_strided_slice %59 {offsets = [0, 32], sizes = [8, 32], strides = [1, 1]} : vector<8x64xf32> to vector<8x32xf32>
    %61 = arith.addf %60, %18 : vector<8x32xf32>
    %cst_19 = arith.constant dense<0.000000e+00> : vector<8x32xf32>
    %62 = tpu.matmul %54, %3, %cst_19 {dimension_numbers = #tpu.dot_dimension_numbers<[1], [0], [0], [1], [0, 0, 1, 1], [], []>} : vector<8x32xf32>, vector<32x32xf32>, vector<8x32xf32> -> vector<8x32xf32>
    %63 = arith.addf %61, %62 : vector<8x32xf32>
    %64 = math.tanh %63 : vector<8x32xf32>
    %65 = vector.extract_strided_slice %16 {offsets = [40, 0], sizes = [8, 32], strides = [1, 1]} : vector<64x32xf32> to vector<8x32xf32>
    %66 = vector.extract_strided_slice %59 {offsets = [0, 0], sizes = [8, 32], strides = [1, 1]} : vector<8x64xf32> to vector<8x32xf32>
    %67 = arith.addf %65, %66 : vector<8x32xf32>
    %68 = math.tanh %67 : vector<8x32xf32>
    %cst_20 = arith.constant dense<0.000000e+00> : vector<8x64xf32>
    %69 = tpu.matmul %68, %12, %cst_20 {dimension_numbers = #tpu.dot_dimension_numbers<[1], [0], [0], [1], [0, 0, 1, 1], [], []>} : vector<8x32xf32>, vector<32x64xf32>, vector<8x64xf32> -> vector<8x64xf32>
    %70 = vector.extract_strided_slice %69 {offsets = [0, 32], sizes = [8, 32], strides = [1, 1]} : vector<8x64xf32> to vector<8x32xf32>
    %71 = arith.addf %70, %18 : vector<8x32xf32>
    %cst_21 = arith.constant dense<0.000000e+00> : vector<8x32xf32>
    %72 = tpu.matmul %64, %3, %cst_21 {dimension_numbers = #tpu.dot_dimension_numbers<[1], [0], [0], [1], [0, 0, 1, 1], [], []>} : vector<8x32xf32>, vector<32x32xf32>, vector<8x32xf32> -> vector<8x32xf32>
    %73 = arith.addf %71, %72 : vector<8x32xf32>
    %74 = math.tanh %73 : vector<8x32xf32>
    %75 = vector.extract_strided_slice %16 {offsets = [48, 0], sizes = [8, 32], strides = [1, 1]} : vector<64x32xf32> to vector<8x32xf32>
    %76 = vector.extract_strided_slice %69 {offsets = [0, 0], sizes = [8, 32], strides = [1, 1]} : vector<8x64xf32> to vector<8x32xf32>
    %77 = arith.addf %75, %76 : vector<8x32xf32>
    %78 = math.tanh %77 : vector<8x32xf32>
    %cst_22 = arith.constant dense<0.000000e+00> : vector<8x64xf32>
    %79 = tpu.matmul %78, %12, %cst_22 {dimension_numbers = #tpu.dot_dimension_numbers<[1], [0], [0], [1], [0, 0, 1, 1], [], []>} : vector<8x32xf32>, vector<32x64xf32>, vector<8x64xf32> -> vector<8x64xf32>
    %80 = vector.extract_strided_slice %79 {offsets = [0, 32], sizes = [8, 32], strides = [1, 1]} : vector<8x64xf32> to vector<8x32xf32>
    %81 = arith.addf %80, %18 : vector<8x32xf32>
    %cst_23 = arith.constant dense<0.000000e+00> : vector<8x32xf32>
    %82 = tpu.matmul %74, %3, %cst_23 {dimension_numbers = #tpu.dot_dimension_numbers<[1], [0], [0], [1], [0, 0, 1, 1], [], []>} : vector<8x32xf32>, vector<32x32xf32>, vector<8x32xf32> -> vector<8x32xf32>
    %83 = arith.addf %81, %82 : vector<8x32xf32>
    %84 = math.tanh %83 : vector<8x32xf32>
    %85 = vector.extract_strided_slice %16 {offsets = [56, 0], sizes = [8, 32], strides = [1, 1]} : vector<64x32xf32> to vector<8x32xf32>
    %86 = vector.extract_strided_slice %79 {offsets = [0, 0], sizes = [8, 32], strides = [1, 1]} : vector<8x64xf32> to vector<8x32xf32>
    %87 = arith.addf %85, %86 : vector<8x32xf32>
    %88 = math.tanh %87 : vector<8x32xf32>
    %cst_24 = arith.constant dense<0.000000e+00> : vector<8x32xf32>
    %89 = tpu.matmul %88, %13, %cst_24 {dimension_numbers = #tpu.dot_dimension_numbers<[1], [0], [0], [1], [0, 0, 1, 1], [], []>} : vector<8x32xf32>, vector<32x32xf32>, vector<8x32xf32> -> vector<8x32xf32>
    %90 = arith.addf %89, %18 : vector<8x32xf32>
    %cst_25 = arith.constant dense<0.000000e+00> : vector<8x32xf32>
    %91 = tpu.matmul %84, %3, %cst_25 {dimension_numbers = #tpu.dot_dimension_numbers<[1], [0], [0], [1], [0, 0, 1, 1], [], []>} : vector<8x32xf32>, vector<32x32xf32>, vector<8x32xf32> -> vector<8x32xf32>
    %92 = arith.addf %90, %91 : vector<8x32xf32>
    %93 = math.tanh %92 : vector<8x32xf32>
    %cst_26 = arith.constant dense<0.000000e+00> : vector<8xf32>
    %94 = vector.multi_reduction <add>, %93, %cst_26 [1] : vector<8x32xf32> to vector<8xf32>
    %95 = vector.shape_cast %94 : vector<8xf32> to vector<8x1xf32>
    %cst_27 = arith.constant 3.200000e+01 : f32
    %96 = vector.broadcast %cst_27 : f32 to vector<8x1xf32>
    %97 = arith.divf %95, %96 : vector<8x1xf32>
    %98 = vector.broadcast %97 : vector<8x1xf32> to vector<8x32xf32>
    %99 = arith.subf %93, %98 : vector<8x32xf32>
    %100 = arith.mulf %99, %99 : vector<8x32xf32>
    %cst_28 = arith.constant dense<0.000000e+00> : vector<8xf32>
    %101 = vector.multi_reduction <add>, %100, %cst_28 [1] : vector<8x32xf32> to vector<8xf32>
    %102 = vector.shape_cast %101 : vector<8xf32> to vector<8x1xf32>
    %cst_29 = arith.constant 3.200000e+01 : f32
    %103 = vector.broadcast %cst_29 : f32 to vector<8x1xf32>
    %104 = arith.divf %102, %103 : vector<8x1xf32>
    %cst_30 = arith.constant 9.99999974E-6 : f32
    %105 = vector.broadcast %cst_30 : f32 to vector<8x1xf32>
    %106 = arith.addf %104, %105 : vector<8x1xf32>
    %107 = math.rsqrt %106 : vector<8x1xf32>
    %108 = vector.broadcast %107 : vector<8x1xf32> to vector<8x32xf32>
    %109 = arith.mulf %99, %108 : vector<8x32xf32>
    %110 = vector.broadcast %9 : vector<1x32xf32> to vector<8x32xf32>
    %111 = arith.mulf %109, %110 : vector<8x32xf32>
    %112 = vector.broadcast %10 : vector<1x32xf32> to vector<8x32xf32>
    %113 = arith.addf %111, %112 : vector<8x32xf32>
    %114 = vector.extract_strided_slice %113 {offsets = [0, 0], sizes = [2, 32], strides = [1, 1]} : vector<8x32xf32> to vector<2x32xf32>
    %cst_31 = arith.constant dense<0.000000e+00> : vector<2x32xf32>
    %115 = tpu.matmul %114, %4, %cst_31 {dimension_numbers = #tpu.dot_dimension_numbers<[1], [0], [0], [1], [0, 0, 1, 1], [], []>} : vector<2x32xf32>, vector<32x32xf32>, vector<2x32xf32> -> vector<2x32xf32>
    %cst_32 = arith.constant dense<0.000000e+00> : vector<2x32xf32>
    %116 = tpu.matmul %1, %5, %cst_32 {dimension_numbers = #tpu.dot_dimension_numbers<[1], [0], [0], [1], [0, 0, 1, 1], [], []>} : vector<2x6xf32>, vector<6x32xf32>, vector<2x32xf32> -> vector<2x32xf32>
    %117 = arith.addf %115, %116 : vector<2x32xf32>
    %118 = vector.broadcast %11 : vector<1x32xf32> to vector<2x32xf32>
    %119 = arith.addf %117, %118 : vector<2x32xf32>
    %cst_33 = arith.constant 0.000000e+00 : f32
    %120 = vector.broadcast %cst_33 : f32 to vector<2x32xf32>
    %121 = arith.maximumf %119, %120 : vector<2x32xf32>
    %c0_34 = arith.constant 0 : index
    %c0_35 = arith.constant 0 : index
    %122 = vector.load %arg4[%c0_34, %c0_35] : memref<40x6xf32, #tpu.memory_space<vmem>>, vector<32x6xf32>
    %c32 = arith.constant 32 : index
    %c0_36 = arith.constant 0 : index
    %123 = vector.load %arg4[%c32, %c0_36] : memref<40x6xf32, #tpu.memory_space<vmem>>, vector<1x6xf32>
    %cst_37 = arith.constant dense<0.000000e+00> : vector<2x6xf32>
    %124 = tpu.matmul %121, %122, %cst_37 {dimension_numbers = #tpu.dot_dimension_numbers<[1], [0], [0], [1], [0, 0, 1, 1], [], []>} : vector<2x32xf32>, vector<32x6xf32>, vector<2x6xf32> -> vector<2x6xf32>
    %125 = vector.broadcast %123 : vector<1x6xf32> to vector<2x6xf32>
    %126 = arith.addf %124, %125 : vector<2x6xf32>
    %cst_38 = arith.constant dense<0xFF800000> : vector<2xf32>
    %127 = vector.multi_reduction <maximumf>, %126, %cst_38 [1] : vector<2x6xf32> to vector<2xf32>
    %128 = vector.shape_cast %127 : vector<2xf32> to vector<2x1xf32>
    %129 = vector.broadcast %128 : vector<2x1xf32> to vector<2x6xf32>
    %130 = arith.subf %126, %129 : vector<2x6xf32>
    %131 = math.exp %130 : vector<2x6xf32>
    %cst_39 = arith.constant dense<0.000000e+00> : vector<2xf32>
    %132 = vector.multi_reduction <add>, %131, %cst_39 [1] : vector<2x6xf32> to vector<2xf32>
    %133 = vector.shape_cast %132 : vector<2xf32> to vector<2x1xf32>
    %134 = tpu.reciprocal %133 : vector<2x1xf32> -> vector<2x1xf32>
    %135 = vector.broadcast %134 : vector<2x1xf32> to vector<2x6xf32>
    %136 = arith.mulf %131, %135 : vector<2x6xf32>
    %c0_40 = arith.constant 0 : index
    %c0_41 = arith.constant 0 : index
    %137 = vector.load %arg5[%c0_40, %c0_41] : memref<2x6xf32, #tpu.memory_space<vmem>>, vector<2x6xf32>
    tpu.vector_store %arg5[%c0_40, %c0_41], %136 {strides = array<i32>} : memref<2x6xf32, #tpu.memory_space<vmem>>, vector<2x6xf32>,
    return
  }
}

</mosaic_0001>

<llo_original>
// kernel: prediction_model_forward.1
$region0: #{prediction_model_forward.1}
  #allocation0 [shape = 'u32[]', space=smem, size = 0x4, offset = 0x4, fixed_abs, tag = 'smem constant byte address 0x4 - core index']
  #allocation1 [shape = 'u32[144,128]{1,0:T(1,128)}', space=vmem, size = 0x12000, scoped, tag = 'internal scratch']
  %s0 = inlined_call_operand.vmem [shape: f32[64,4], index: 0, kind: input, shape index: {}]
  %s1 = inlined_call_operand.vmem [shape: f32[2,6], index: 1, kind: input, shape index: {}]
  %s2 = inlined_call_operand.vmem [shape: f32[88,32], index: 2, kind: input, shape index: {}]
  %s3 = inlined_call_operand.vmem [shape: f32[32,64], index: 3, kind: input, shape index: {}]
  %s4 = inlined_call_operand.vmem [shape: f32[40,6], index: 4, kind: input, shape index: {}]
  %s5 = inlined_call_operand.hbm [shape: f32[2,6], index: 5, kind: output, shape index: {}]
  %s6 = sld [smem:[#allocation0]]
  $region30: #{prediction_model_forward.1} parent=0
    _
  %s8 = ssub.s32 1, %s6
  %s9 = scalar_select 0, %s8, %s6
  $region1: #{prediction_model_forward.1} parent=0
    #allocation2 [shape = 'u8[1024]{0}', space=vmem, size = 0x400, scoped, tag = 'output window, operand 0, single buffered']
    #allocation3 [shape = 's32[1]{0}', space=sflag, size = 0x4, scoped, tag = 'scoped memory for prediction_model_forward.1']
    %10 = vsyncpa [#allocation3], 0
    // Predicated region
    $region2: #{prediction_model_forward.1} parent=1 // pred_check
      _
    $region3: #{prediction_model_forward.1} parent=1 // pred_check_branch
      %12 = sbr.rel (0) target = $region5
    $region4: #{prediction_model_forward.1} parent=1 // pred_region
      _
    $region5: #{prediction_model_forward.1} parent=1 // pred_fallthru
      _
    // Predicated region
    $region6: #{prediction_model_forward.1} parent=1 // pred_check
      _
    $region7: #{prediction_model_forward.1} parent=1 // pred_check_branch
      %14 = sbr.rel (0) target = $region9
    $region8: #{prediction_model_forward.1} parent=1 // pred_region
      _
    $region9: #{prediction_model_forward.1} parent=1 // pred_fallthru
      _
    // Predicated region
    $region10: #{prediction_model_forward.1} parent=1 // pred_check
      _
    $region11: #{prediction_model_forward.1} parent=1 // pred_check_branch
      %16 = sbr.rel (0) target = $region13
    $region12: #{prediction_model_forward.1} parent=1 // pred_region
      _
    $region13: #{prediction_model_forward.1} parent=1 // pred_fallthru
      _
    // Predicated region
    $region14: #{prediction_model_forward.1} parent=1 // pred_check
      _
    $region15: #{prediction_model_forward.1} parent=1 // pred_check_branch
      %18 = sbr.rel (0) target = $region17
    $region16: #{prediction_model_forward.1} parent=1 // pred_region
      _
    $region17: #{prediction_model_forward.1} parent=1 // pred_fallthru
      _
    // Predicated region
    $region18: #{prediction_model_forward.1} parent=1 // pred_check
      _
    $region19: #{prediction_model_forward.1} parent=1 // pred_check_branch
      %20 = sbr.rel (0) target = $region21
    $region20: #{prediction_model_forward.1} parent=1 // pred_region
      _
    $region21: #{prediction_model_forward.1} parent=1 // pred_fallthru
      _
    %v21 = vld [vmem:[%s0] sm:$0xff]
    %v22 = vld [vmem:[%s0 + $0x8] sm:$0xff]
    %v23 = vld [vmem:[%s0 + $0x10] sm:$0xff]
    %v24 = vld [vmem:[%s0 + $0x18] sm:$0xff]
    %v25 = vld [vmem:[%s0 + $0x20] sm:$0xff]
    %v26 = vld [vmem:[%s0 + $0x28] sm:$0xff]
    %v27 = vld [vmem:[%s0 + $0x30] sm:$0xff]
    %v28 = vld [vmem:[%s0 + $0x38] sm:$0xff]
    %v29 = vld [vmem:[%s1] sm:$0x3]
    %v30 = vld [vmem:[%s2] sm:$0xf]
    %v31 = vld [vmem:[%s2 + $0x8] sm:$0xff]
    %v32 = vld [vmem:[%s2 + $0x10] sm:$0xff]
    %v33 = vld [vmem:[%s2 + $0x18] sm:$0xff]
    %v34 = vld [vmem:[%s2 + $0x20] sm:$0xff]
    %v35 = vld [vmem:[%s2 + $0x28] sm:$0xff]
    %v36 = vld [vmem:[%s2 + $0x30] sm:$0xff]
    %v37 = vld [vmem:[%s2 + $0x38] sm:$0xff]
    %v38 = vld [vmem:[%s2 + $0x40] sm:$0xff]
    %v39 = vld [vmem:[%s2 + $0x48] sm:$0x3f]
    %v40 = vld [vmem:[%s2 + $0x50] sm:$0xff]
    %v41 = vld [vmem:[%s3] sm:$0xff]
    %v42 = vld [vmem:[%s3 + $0x8] sm:$0xff]
    %v43 = vld [vmem:[%s3 + $0x10] sm:$0xff]
    %v44 = vld [vmem:[%s3 + $0x18] sm:$0xff]
    %v45 = vlaneseq
    %v46 = vshrl.u32 %v45, 7
    %v47 = vsub.s32 0, %v46
    %v48 = vrot.slane %v40, %v47
    %vm49 = vcmask 31744
    %v51 = vsel %vm49, %v21, 0
    %v54 = vsel %vm49, %v22, 0
    %v57 = vsel %vm49, %v23, 0
    %v60 = vsel %vm49, %v24, 0
    %v63 = vsel %vm49, %v25, 0
    %v66 = vsel %vm49, %v26, 0
    %v69 = vsel %vm49, %v27, 0
    %v72 = vsel %vm49, %v28, 0
    %vm74 = vcmask 1043456
    %v76 = vsel %vm74, %v30, 0
    %78 = vmatprep.subr.mxu0 0.0
    %79 = vmatpush1.msra.mxu0 0.0
    %80 = vmatprep.subr.mxu0 0.0
    %81 = vmatpush1.msra.mxu0 0.0
    %82 = vmatprep.subr.mxu0 0.0
    %83 = vmatpush1.msra.mxu0 0.0
    %84 = vmatprep.subr.mxu0 0.0
    %85 = vmatpush1.msra.mxu0 0.0
    %86 = vmatprep.subr.mxu0 0.0
    %87 = vmatpush1.msra.mxu0 0.0
    %88 = vmatprep.subr.mxu0 0.0
    %89 = vmatpush1.msra.mxu0 0.0
    %90 = vmatprep.subr.mxu0 0.0
    %91 = vmatpush1.msra.mxu0 0.0
    %92 = vmatprep.subr.mxu0 0.0
    %93 = vmatpush1.msra.mxu0 0.0
    %94 = vmatprep.subr.mxu0 0.0
    %95 = vmatpush1.msra.mxu0 0.0
    %96 = vmatprep.subr.mxu0 0.0
    %97 = vmatpush1.msra.mxu0 0.0
    %98 = vmatprep.subr.mxu0 0.0
    %99 = vmatpush1.msra.mxu0 0.0
    %100 = vmatprep.subr.mxu0 0.0
    %101 = vmatpush1.msra.mxu0 0.0
    %102 = vmatprep.subr.mxu0 0.0
    %103 = vmatpush1.msra.mxu0 0.0
    %104 = vmatprep.subr.mxu0 0.0
    %105 = vmatpush1.msra.mxu0 0.0
    %106 = vmatprep.subr.mxu0 0.0
    %107 = vmatpush1.msra.mxu0 0.0
    %108 = vmatprep.subr.mxu0 0.0
    %109 = vmatpush1.msra.mxu0 %v76
    %110 = vmatprep.subr.mxu0 0.0
    %111 = vmatpush2.msra.mxu0 0.0
    %112 = vmatprep.subr.mxu0 0.0
    %113 = vmatpush2.msra.mxu0 0.0
    %114 = vmatprep.subr.mxu0 0.0
    %115 = vmatpush2.msra.mxu0 0.0
    %116 = vmatprep.subr.mxu0 0.0
    %117 = vmatpush2.msra.mxu0 0.0
    %118 = vmatprep.subr.mxu0 0.0
    %119 = vmatpush2.msra.mxu0 0.0
    %120 = vmatprep.subr.mxu0 0.0
    %121 = vmatpush2.msra.mxu0 0.0
    %122 = vmatprep.subr.mxu0 0.0
    %123 = vmatpush2.msra.mxu0 0.0
    %124 = vmatprep.subr.mxu0 0.0
    %125 = vmatpush2.msra.mxu0 0.0
    %126 = vmatprep.subr.mxu0 0.0
    %127 = vmatpush2.msra.mxu0 0.0
    %128 = vmatprep.subr.mxu0 0.0
    %129 = vmatpush2.msra.mxu0 0.0
    %130 = vmatprep.subr.mxu0 0.0
    %131 = vmatpush2.msra.mxu0 0.0
    %132 = vmatprep.subr.mxu0 0.0
    %133 = vmatpush2.msra.mxu0 0.0
    %134 = vmatprep.subr.mxu0 0.0
    %135 = vmatpush2.msra.mxu0 0.0
    %136 = vmatprep.subr.mxu0 0.0
    %137 = vmatpush2.msra.mxu0 0.0
    %138 = vmatprep.subr.mxu0 0.0
    %139 = vmatpush2.msra.mxu0 0.0
    %140 = vmatprep.subr.mxu0 0.0
    %141 = vmatpush2.msra.mxu0 0.0
    %142 = vmatprep.mubr.f32.mxu0 0.0
    %143 = vmatmul.mubr.f32.gmra.mxu0 %v51
    %v144 = vpop.f32.mrf.mxu0
    %v145 = vadd.f32 %v48, %v144
    %v146 = vpop.f32.mrf.mxu0
    %147 = vmatprep.mubr.f32.mxu0 0.0
    %148 = vmatmul.mubr.f32.gmra.mxu0 %v54
    %v149 = vpop.f32.mrf.mxu0
    %v150 = vadd.f32 %v48, %v149
    %v151 = vpop.f32.mrf.mxu0
    %152 = vmatprep.mubr.f32.mxu0 0.0
    %153 = vmatmul.mubr.f32.gmra.mxu0 %v57
    %v154 = vpop.f32.mrf.mxu0
    %v155 = vadd.f32 %v48, %v154
    %v156 = vpop.f32.mrf.mxu0
    %157 = vmatprep.mubr.f32.mxu0 0.0
    %158 = vmatmul.mubr.f32.gmra.mxu0 %v60
    %v159 = vpop.f32.mrf.mxu0
    %v160 = vadd.f32 %v48, %v159
    %v161 = vpop.f32.mrf.mxu0
    %162 = vmatprep.mubr.f32.mxu0 0.0
    %163 = vmatmul.mubr.f32.gmra.mxu0 %v63
    %v164 = vpop.f32.mrf.mxu0
    %v165 = vadd.f32 %v48, %v164
    %v166 = vpop.f32.mrf.mxu0
    %167 = vmatprep.mubr.f32.mxu0 0.0
    %168 = vmatmul.mubr.f32.gmra.mxu0 %v66
    %v169 = vpop.f32.mrf.mxu0
    %v170 = vadd.f32 %v48, %v169
    %v171 = vpop.f32.mrf.mxu0
    %172 = vmatprep.mubr.f32.mxu0 0.0
    %173 = vmatmul.mubr.f32.gmra.mxu0 %v69
    %v174 = vpop.f32.mrf.mxu0
    %v175 = vadd.f32 %v48, %v174
    %v176 = vpop.f32.mrf.mxu0
    %177 = vmatprep.mubr.f32.mxu0 0.0
    %178 = vmatmul.mubr.f32.gmra.mxu0 %v72
    %v179 = vpop.f32.mrf.mxu0
    %v180 = vadd.f32 %v48, %v179
    %v181 = vpop.f32.mrf.mxu0
    %182 = vdwg.mxu0
    %v183 = vlaneseq
    %v184 = vshrl.u32 %v183, 7
    %v185 = vsub.s32 1, %v184
    %v186 = vrot.slane %v40, %v185
    %v187 = vtanh.pop %v145
    %vm188 = vcmask 261120
    %v190 = vsel %vm188, %v187, 0
    %192 = vmatprep.subr.mxu0 0.0
    %193 = vmatpush1.msra.mxu0 0.0
    %194 = vmatprep.subr.mxu0 0.0
    %195 = vmatpush1.msra.mxu0 0.0
    %196 = vmatprep.subr.mxu0 0.0
    %197 = vmatpush1.msra.mxu0 0.0
    %198 = vmatprep.subr.mxu0 0.0
    %199 = vmatpush1.msra.mxu0 0.0
    %200 = vmatprep.subr.mxu0 0.0
    %201 = vmatpush1.msra.mxu0 0.0
    %202 = vmatprep.subr.mxu0 0.0
    %203 = vmatpush1.msra.mxu0 0.0
    %204 = vmatprep.subr.mxu0 0.0
    %205 = vmatpush1.msra.mxu0 0.0
    %206 = vmatprep.subr.mxu0 0.0
    %207 = vmatpush1.msra.mxu0 0.0
    %208 = vmatprep.subr.mxu0 0.0
    %209 = vmatpush1.msra.mxu0 0.0
    %210 = vmatprep.subr.mxu0 0.0
    %211 = vmatpush1.msra.mxu0 0.0
    %212 = vmatprep.subr.mxu0 0.0
    %213 = vmatpush1.msra.mxu0 0.0
    %214 = vmatprep.subr.mxu0 0.0
    %215 = vmatpush1.msra.mxu0 0.0
    %216 = vmatprep.subr.mxu0 0.0
    %217 = vmatpush1.msra.mxu0 %v44
    %218 = vmatprep.subr.mxu0 0.0
    %219 = vmatpush1.msra.mxu0 %v43
    %220 = vmatprep.subr.mxu0 0.0
    %221 = vmatpush1.msra.mxu0 %v42
    %222 = vmatprep.subr.mxu0 0.0
    %223 = vmatpush1.msra.mxu0 %v41
    %224 = vmatprep.subr.mxu0 0.0
    %225 = vmatpush2.msra.mxu0 0.0
    %226 = vmatprep.subr.mxu0 0.0
    %227 = vmatpush2.msra.mxu0 0.0
    %228 = vmatprep.subr.mxu0 0.0
    %229 = vmatpush2.msra.mxu0 0.0
    %230 = vmatprep.subr.mxu0 0.0
    %231 = vmatpush2.msra.mxu0 0.0
    %232 = vmatprep.subr.mxu0 0.0
    %233 = vmatpush2.msra.mxu0 0.0
    %234 = vmatprep.subr.mxu0 0.0
    %235 = vmatpush2.msra.mxu0 0.0
    %236 = vmatprep.subr.mxu0 0.0
    %237 = vmatpush2.msra.mxu0 0.0
    %238 = vmatprep.subr.mxu0 0.0
    %239 = vmatpush2.msra.mxu0 0.0
    %240 = vmatprep.subr.mxu0 0.0
    %241 = vmatpush2.msra.mxu0 0.0
    %242 = vmatprep.subr.mxu0 0.0
    %243 = vmatpush2.msra.mxu0 0.0
    %244 = vmatprep.subr.mxu0 0.0
    %245 = vmatpush2.msra.mxu0 0.0
    %246 = vmatprep.subr.mxu0 0.0
    %247 = vmatpush2.msra.mxu0 0.0
    %248 = vmatprep.subr.mxu0 0.0
    %249 = vmatpush2.msra.mxu0 0.0
    %250 = vmatprep.subr.mxu0 0.0
    %251 = vmatpush2.msra.mxu0 0.0
    %252 = vmatprep.subr.mxu0 0.0
    %253 = vmatpush2.msra.mxu0 0.0
    %254 = vmatprep.subr.mxu0 0.0
    %255 = vmatpush2.msra.mxu0 0.0
    %256 = vmatprep.mubr.f32.mxu0 0.0
    %257 = vmatmul.mubr.f32.gmra.mxu0 %v190
    %v258 = vpop.f32.mrf.mxu0
    %v259 = vadd.f32 0.0, %v258
    %v260 = vpop.f32.mrf.mxu0
    %261 = vdwg.mxu0
    %263 = vrot.lane.b32.xlu0 %v186, 32
    %v264 = vpop.permute.xlu0 %263
    %v266 = vadd.f32 %v259, %v264
    %v267 = vtanh.pop %v266
    %v268 = vadd.f32 %v150, %v259
    %v269 = vtanh.pop %v268
    %v271 = vsel %vm188, %v269, 0
    %273 = vmatprep.subr.mxu0 0.0
    %274 = vmatpush1.msra.mxu0 0.0
    %275 = vmatprep.subr.mxu0 0.0
    %276 = vmatpush1.msra.mxu0 0.0
    %277 = vmatprep.subr.mxu0 0.0
    %278 = vmatpush1.msra.mxu0 0.0
    %279 = vmatprep.subr.mxu0 0.0
    %280 = vmatpush1.msra.mxu0 0.0
    %281 = vmatprep.subr.mxu0 0.0
    %282 = vmatpush1.msra.mxu0 0.0
    %283 = vmatprep.subr.mxu0 0.0
    %284 = vmatpush1.msra.mxu0 0.0
    %285 = vmatprep.subr.mxu0 0.0
    %286 = vmatpush1.msra.mxu0 0.0
    %287 = vmatprep.subr.mxu0 0.0
    %288 = vmatpush1.msra.mxu0 0.0
    %289 = vmatprep.subr.mxu0 0.0
    %290 = vmatpush1.msra.mxu0 0.0
    %291 = vmatprep.subr.mxu0 0.0
    %292 = vmatpush1.msra.mxu0 0.0
    %293 = vmatprep.subr.mxu0 0.0
    %294 = vmatpush1.msra.mxu0 0.0
    %295 = vmatprep.subr.mxu0 0.0
    %296 = vmatpush1.msra.mxu0 0.0
    %297 = vmatprep.subr.mxu0 0.0
    %298 = vmatpush1.msra.mxu0 %v44
    %299 = vmatprep.subr.mxu0 0.0
    %300 = vmatpush1.msra.mxu0 %v43
    %301 = vmatprep.subr.mxu0 0.0
    %302 = vmatpush1.msra.mxu0 %v42
    %303 = vmatprep.subr.mxu0 0.0
    %304 = vmatpush1.msra.mxu0 %v41
    %305 = vmatprep.subr.mxu0 0.0
    %306 = vmatpush2.msra.mxu0 0.0
    %307 = vmatprep.subr.mxu0 0.0
    %308 = vmatpush2.msra.mxu0 0.0
    %309 = vmatprep.subr.mxu0 0.0
    %310 = vmatpush2.msra.mxu0 0.0
    %311 = vmatprep.subr.mxu0 0.0
    %312 = vmatpush2.msra.mxu0 0.0
    %313 = vmatprep.subr.mxu0 0.0
    %314 = vmatpush2.msra.mxu0 0.0
    %315 = vmatprep.subr.mxu0 0.0
    %316 = vmatpush2.msra.mxu0 0.0
    %317 = vmatprep.subr.mxu0 0.0
    %318 = vmatpush2.msra.mxu0 0.0
    %319 = vmatprep.subr.mxu0 0.0
    %320 = vmatpush2.msra.mxu0 0.0
    %321 = vmatprep.subr.mxu0 0.0
    %322 = vmatpush2.msra.mxu0 0.0
    %323 = vmatprep.subr.mxu0 0.0
    %324 = vmatpush2.msra.mxu0 0.0
    %325 = vmatprep.subr.mxu0 0.0
    %326 = vmatpush2.msra.mxu0 0.0
    %327 = vmatprep.subr.mxu0 0.0
    %328 = vmatpush2.msra.mxu0 0.0
    %329 = vmatprep.subr.mxu0 0.0
    %330 = vmatpush2.msra.mxu0 0.0
    %331 = vmatprep.subr.mxu0 0.0
    %332 = vmatpush2.msra.mxu0 0.0
    %333 = vmatprep.subr.mxu0 0.0
    %334 = vmatpush2.msra.mxu0 0.0
    %335 = vmatprep.subr.mxu0 0.0
    %336 = vmatpush2.msra.mxu0 0.0
    %337 = vmatprep.mubr.f32.mxu0 0.0
    %338 = vmatmul.mubr.f32.gmra.mxu0 %v271
    %v339 = vpop.f32.mrf.mxu0
    %v340 = vadd.f32 0.0, %v339
    %v341 = vpop.f32.mrf.mxu0
    %342 = vdwg.mxu0
    %v343 = vadd.f32 %v340, %v264
    %345 = vrot.lane.b32.xlu0 %v267, 96
    %v346 = vpop.permute.xlu0 %345
    %v347 = vsel %vm188, %v346, 0
    %349 = vmatprep.subr.mxu0 0.0
    %350 = vmatpush1.msra.mxu0 0.0
    %351 = vmatprep.subr.mxu0 0.0
    %352 = vmatpush1.msra.mxu0 0.0
    %353 = vmatprep.subr.mxu0 0.0
    %354 = vmatpush1.msra.mxu0 0.0
    %355 = vmatprep.subr.mxu0 0.0
    %356 = vmatpush1.msra.mxu0 0.0
    %357 = vmatprep.subr.mxu0 0.0
    %358 = vmatpush1.msra.mxu0 0.0
    %359 = vmatprep.subr.mxu0 0.0
    %360 = vmatpush1.msra.mxu0 0.0
    %361 = vmatprep.subr.mxu0 0.0
    %362 = vmatpush1.msra.mxu0 0.0
    %363 = vmatprep.subr.mxu0 0.0
    %364 = vmatpush1.msra.mxu0 0.0
    %365 = vmatprep.subr.mxu0 0.0
    %366 = vmatpush1.msra.mxu0 0.0
    %367 = vmatprep.subr.mxu0 0.0
    %368 = vmatpush1.msra.mxu0 0.0
    %369 = vmatprep.subr.mxu0 0.0
    %370 = vmatpush1.msra.mxu0 0.0
    %371 = vmatprep.subr.mxu0 0.0
    %372 = vmatpush1.msra.mxu0 0.0
    %373 = vmatprep.subr.mxu0 0.0
    %374 = vmatpush1.msra.mxu0 %v34
    %375 = vmatprep.subr.mxu0 0.0
    %376 = vmatpush1.msra.mxu0 %v33
    %377 = vmatprep.subr.mxu0 0.0
    %378 = vmatpush1.msra.mxu0 %v32
    %379 = vmatprep.subr.mxu0 0.0
    %380 = vmatpush1.msra.mxu0 %v31
    %381 = vmatprep.subr.mxu0 0.0
    %382 = vmatpush2.msra.mxu0 0.0
    %383 = vmatprep.subr.mxu0 0.0
    %384 = vmatpush2.msra.mxu0 0.0
    %385 = vmatprep.subr.mxu0 0.0
    %386 = vmatpush2.msra.mxu0 0.0
    %387 = vmatprep.subr.mxu0 0.0
    %388 = vmatpush2.msra.mxu0 0.0
    %389 = vmatprep.subr.mxu0 0.0
    %390 = vmatpush2.msra.mxu0 0.0
    %391 = vmatprep.subr.mxu0 0.0
    %392 = vmatpush2.msra.mxu0 0.0
    %393 = vmatprep.subr.mxu0 0.0
    %394 = vmatpush2.msra.mxu0 0.0
    %395 = vmatprep.subr.mxu0 0.0
    %396 = vmatpush2.msra.mxu0 0.0
    %397 = vmatprep.subr.mxu0 0.0
    %398 = vmatpush2.msra.mxu0 0.0
    %399 = vmatprep.subr.mxu0 0.0
    %400 = vmatpush2.msra.mxu0 0.0
    %401 = vmatprep.subr.mxu0 0.0
    %402 = vmatpush2.msra.mxu0 0.0
    %403 = vmatprep.subr.mxu0 0.0
    %404 = vmatpush2.msra.mxu0 0.0
    %405 = vmatprep.subr.mxu0 0.0
    %406 = vmatpush2.msra.mxu0 0.0
    %407 = vmatprep.subr.mxu0 0.0
    %408 = vmatpush2.msra.mxu0 0.0
    %409 = vmatprep.subr.mxu0 0.0
    %410 = vmatpush2.msra.mxu0 0.0
    %411 = vmatprep.subr.mxu0 0.0
    %412 = vmatpush2.msra.mxu0 0.0
    %413 = vmatprep.mubr.f32.mxu0 0.0
    %414 = vmatmul.mubr.f32.gmra.mxu0 %v347
    %v415 = vpop.f32.mrf.mxu0
    %v416 = vadd.f32 0.0, %v415
    %v417 = vpop.f32.mrf.mxu0
    %418 = vdwg.mxu0
    %420 = vrot.lane.b32.xlu0 %v416, 32
    %v421 = vpop.permute.xlu0 %420
    %v423 = vadd.f32 %v343, %v421
    %v424 = vtanh.pop %v423
    %v425 = vadd.f32 %v155, %v340
    %v426 = vtanh.pop %v425
    %v428 = vsel %vm188, %v426, 0
    %430 = vmatprep.subr.mxu0 0.0
    %431 = vmatpush1.msra.mxu0 0.0
    %432 = vmatprep.subr.mxu0 0.0
    %433 = vmatpush1.msra.mxu0 0.0
    %434 = vmatprep.subr.mxu0 0.0
    %435 = vmatpush1.msra.mxu0 0.0
    %436 = vmatprep.subr.mxu0 0.0
    %437 = vmatpush1.msra.mxu0 0.0
    %438 = vmatprep.subr.mxu0 0.0
    %439 = vmatpush1.msra.mxu0 0.0
    %440 = vmatprep.subr.mxu0 0.0
    %441 = vmatpush1.msra.mxu0 0.0
    %442 = vmatprep.subr.mxu0 0.0
    %443 = vmatpush1.msra.mxu0 0.0
    %444 = vmatprep.subr.mxu0 0.0
    %445 = vmatpush1.msra.mxu0 0.0
    %446 = vmatprep.subr.mxu0 0.0
    %447 = vmatpush1.msra.mxu0 0.0
    %448 = vmatprep.subr.mxu0 0.0
    %449 = vmatpush1.msra.mxu0 0.0
    %450 = vmatprep.subr.mxu0 0.0
    %451 = vmatpush1.msra.mxu0 0.0
    %452 = vmatprep.subr.mxu0 0.0
    %453 = vmatpush1.msra.mxu0 0.0
    %454 = vmatprep.subr.mxu0 0.0
    %455 = vmatpush1.msra.mxu0 %v44
    %456 = vmatprep.subr.mxu0 0.0
    %457 = vmatpush1.msra.mxu0 %v43
    %458 = vmatprep.subr.mxu0 0.0
    %459 = vmatpush1.msra.mxu0 %v42
    %460 = vmatprep.subr.mxu0 0.0
    %461 = vmatpush1.msra.mxu0 %v41
    %462 = vmatprep.subr.mxu0 0.0
    %463 = vmatpush2.msra.mxu0 0.0
    %464 = vmatprep.subr.mxu0 0.0
    %465 = vmatpush2.msra.mxu0 0.0
    %466 = vmatprep.subr.mxu0 0.0
    %467 = vmatpush2.msra.mxu0 0.0
    %468 = vmatprep.subr.mxu0 0.0
    %469 = vmatpush2.msra.mxu0 0.0
    %470 = vmatprep.subr.mxu0 0.0
    %471 = vmatpush2.msra.mxu0 0.0
    %472 = vmatprep.subr.mxu0 0.0
    %473 = vmatpush2.msra.mxu0 0.0
    %474 = vmatprep.subr.mxu0 0.0
    %475 = vmatpush2.msra.mxu0 0.0
    %476 = vmatprep.subr.mxu0 0.0
    %477 = vmatpush2.msra.mxu0 0.0
    %478 = vmatprep.subr.mxu0 0.0
    %479 = vmatpush2.msra.mxu0 0.0
    %480 = vmatprep.subr.mxu0 0.0
    %481 = vmatpush2.msra.mxu0 0.0
    %482 = vmatprep.subr.mxu0 0.0
    %483 = vmatpush2.msra.mxu0 0.0
    %484 = vmatprep.subr.mxu0 0.0
    %485 = vmatpush2.msra.mxu0 0.0
    %486 = vmatprep.subr.mxu0 0.0
    %487 = vmatpush2.msra.mxu0 0.0
    %488 = vmatprep.subr.mxu0 0.0
    %489 = vmatpush2.msra.mxu0 0.0
    %490 = vmatprep.subr.mxu0 0.0
    %491 = vmatpush2.msra.mxu0 0.0
    %492 = vmatprep.subr.mxu0 0.0
    %493 = vmatpush2.msra.mxu0 0.0
    %494 = vmatprep.mubr.f32.mxu0 0.0
    %495 = vmatmul.mubr.f32.gmra.mxu0 %v428
    %v496 = vpop.f32.mrf.mxu0
    %v497 = vadd.f32 0.0, %v496
    %v498 = vpop.f32.mrf.mxu0
    %499 = vdwg.mxu0
    %v500 = vadd.f32 %v497, %v264
    %502 = vrot.lane.b32.xlu0 %v424, 96
    %v503 = vpop.permute.xlu0 %502
    %v504 = vsel %vm188, %v503, 0
    %506 = vmatprep.subr.mxu0 0.0
    %507 = vmatpush1.msra.mxu0 0.0
    %508 = vmatprep.subr.mxu0 0.0
    %509 = vmatpush1.msra.mxu0 0.0
    %510 = vmatprep.subr.mxu0 0.0
    %511 = vmatpush1.msra.mxu0 0.0
    %512 = vmatprep.subr.mxu0 0.0
    %513 = vmatpush1.msra.mxu0 0.0
    %514 = vmatprep.subr.mxu0 0.0
    %515 = vmatpush1.msra.mxu0 0.0
    %516 = vmatprep.subr.mxu0 0.0
    %517 = vmatpush1.msra.mxu0 0.0
    %518 = vmatprep.subr.mxu0 0.0
    %519 = vmatpush1.msra.mxu0 0.0
    %520 = vmatprep.subr.mxu0 0.0
    %521 = vmatpush1.msra.mxu0 0.0
    %522 = vmatprep.subr.mxu0 0.0
    %523 = vmatpush1.msra.mxu0 0.0
    %524 = vmatprep.subr.mxu0 0.0
    %525 = vmatpush1.msra.mxu0 0.0
    %526 = vmatprep.subr.mxu0 0.0
    %527 = vmatpush1.msra.mxu0 0.0
    %528 = vmatprep.subr.mxu0 0.0
    %529 = vmatpush1.msra.mxu0 0.0
    %530 = vmatprep.subr.mxu0 0.0
    %531 = vmatpush1.msra.mxu0 %v34
    %532 = vmatprep.subr.mxu0 0.0
    %533 = vmatpush1.msra.mxu0 %v33
    %534 = vmatprep.subr.mxu0 0.0
    %535 = vmatpush1.msra.mxu0 %v32
    %536 = vmatprep.subr.mxu0 0.0
    %537 = vmatpush1.msra.mxu0 %v31
    %538 = vmatprep.subr.mxu0 0.0
    %539 = vmatpush2.msra.mxu0 0.0
    %540 = vmatprep.subr.mxu0 0.0
    %541 = vmatpush2.msra.mxu0 0.0
    %542 = vmatprep.subr.mxu0 0.0
    %543 = vmatpush2.msra.mxu0 0.0
    %544 = vmatprep.subr.mxu0 0.0
    %545 = vmatpush2.msra.mxu0 0.0
    %546 = vmatprep.subr.mxu0 0.0
    %547 = vmatpush2.msra.mxu0 0.0
    %548 = vmatprep.subr.mxu0 0.0
    %549 = vmatpush2.msra.mxu0 0.0
    %550 = vmatprep.subr.mxu0 0.0
    %551 = vmatpush2.msra.mxu0 0.0
    %552 = vmatprep.subr.mxu0 0.0
    %553 = vmatpush2.msra.mxu0 0.0
    %554 = vmatprep.subr.mxu0 0.0
    %555 = vmatpush2.msra.mxu0 0.0
    %556 = vmatprep.subr.mxu0 0.0
    %557 = vmatpush2.msra.mxu0 0.0
    %558 = vmatprep.subr.mxu0 0.0
    %559 = vmatpush2.msra.mxu0 0.0
    %560 = vmatprep.subr.mxu0 0.0
    %561 = vmatpush2.msra.mxu0 0.0
    %562 = vmatprep.subr.mxu0 0.0
    %563 = vmatpush2.msra.mxu0 0.0
    %564 = vmatprep.subr.mxu0 0.0
    %565 = vmatpush2.msra.mxu0 0.0
    %566 = vmatprep.subr.mxu0 0.0
    %567 = vmatpush2.msra.mxu0 0.0
    %568 = vmatprep.subr.mxu0 0.0
    %569 = vmatpush2.msra.mxu0 0.0
    %570 = vmatprep.mubr.f32.mxu0 0.0
    %571 = vmatmul.mubr.f32.gmra.mxu0 %v504
    %v572 = vpop.f32.mrf.mxu0
    %v573 = vadd.f32 0.0, %v572
    %v574 = vpop.f32.mrf.mxu0
    %575 = vdwg.mxu0
    %577 = vrot.lane.b32.xlu0 %v573, 32
    %v578 = vpop.permute.xlu0 %577
    %v580 = vadd.f32 %v500, %v578
    %v581 = vtanh.pop %v580
    %v582 = vadd.f32 %v160, %v497
    %v583 = vtanh.pop %v582
    %v585 = vsel %vm188, %v583, 0
    %587 = vmatprep.subr.mxu0 0.0
    %588 = vmatpush1.msra.mxu0 0.0
    %589 = vmatprep.subr.mxu0 0.0
    %590 = vmatpush1.msra.mxu0 0.0
    %591 = vmatprep.subr.mxu0 0.0
    %592 = vmatpush1.msra.mxu0 0.0
    %593 = vmatprep.subr.mxu0 0.0
    %594 = vmatpush1.msra.mxu0 0.0
    %595 = vmatprep.subr.mxu0 0.0
    %596 = vmatpush1.msra.mxu0 0.0
    %597 = vmatprep.subr.mxu0 0.0
    %598 = vmatpush1.msra.mxu0 0.0
    %599 = vmatprep.subr.mxu0 0.0
    %600 = vmatpush1.msra.mxu0 0.0
    %601 = vmatprep.subr.mxu0 0.0
    %602 = vmatpush1.msra.mxu0 0.0
    %603 = vmatprep.subr.mxu0 0.0
    %604 = vmatpush1.msra.mxu0 0.0
    %605 = vmatprep.subr.mxu0 0.0
    %606 = vmatpush1.msra.mxu0 0.0
    %607 = vmatprep.subr.mxu0 0.0
    %608 = vmatpush1.msra.mxu0 0.0
    %609 = vmatprep.subr.mxu0 0.0
    %610 = vmatpush1.msra.mxu0 0.0
    %611 = vmatprep.subr.mxu0 0.0
    %612 = vmatpush1.msra.mxu0 %v44
    %613 = vmatprep.subr.mxu0 0.0
    %614 = vmatpush1.msra.mxu0 %v43
    %615 = vmatprep.subr.mxu0 0.0
    %616 = vmatpush1.msra.mxu0 %v42
    %617 = vmatprep.subr.mxu0 0.0
    %618 = vmatpush1.msra.mxu0 %v41
    %619 = vmatprep.subr.mxu0 0.0
    %620 = vmatpush2.msra.mxu0 0.0
    %621 = vmatprep.subr.mxu0 0.0
    %622 = vmatpush2.msra.mxu0 0.0
    %623 = vmatprep.subr.mxu0 0.0
    %624 = vmatpush2.msra.mxu0 0.0
    %625 = vmatprep.subr.mxu0 0.0
    %626 = vmatpush2.msra.mxu0 0.0
    %627 = vmatprep.subr.mxu0 0.0
    %628 = vmatpush2.msra.mxu0 0.0
    %629 = vmatprep.subr.mxu0 0.0
    %630 = vmatpush2.msra.mxu0 0.0
    %631 = vmatprep.subr.mxu0 0.0
    %632 = vmatpush2.msra.mxu0 0.0
    %633 = vmatprep.subr.mxu0 0.0
    %634 = vmatpush2.msra.mxu0 0.0
    %635 = vmatprep.subr.mxu0 0.0
    %636 = vmatpush2.msra.mxu0 0.0
    %637 = vmatprep.subr.mxu0 0.0
    %638 = vmatpush2.msra.mxu0 0.0
    %639 = vmatprep.subr.mxu0 0.0
    %640 = vmatpush2.msra.mxu0 0.0
    %641 = vmatprep.subr.mxu0 0.0
    %642 = vmatpush2.msra.mxu0 0.0
    %643 = vmatprep.subr.mxu0 0.0
    %644 = vmatpush2.msra.mxu0 0.0
    %645 = vmatprep.subr.mxu0 0.0
    %646 = vmatpush2.msra.mxu0 0.0
    %647 = vmatprep.subr.mxu0 0.0
    %648 = vmatpush2.msra.mxu0 0.0
    %649 = vmatprep.subr.mxu0 0.0
    %650 = vmatpush2.msra.mxu0 0.0
    %651 = vmatprep.mubr.f32.mxu0 0.0
    %652 = vmatmul.mubr.f32.gmra.mxu0 %v585
    %v653 = vpop.f32.mrf.mxu0
    %v654 = vadd.f32 0.0, %v653
    %v655 = vpop.f32.mrf.mxu0
    %656 = vdwg.mxu0
    %v657 = vadd.f32 %v654, %v264
    %659 = vrot.lane.b32.xlu0 %v581, 96
    %v660 = vpop.permute.xlu0 %659
    %v661 = vsel %vm188, %v660, 0
    %663 = vmatprep.subr.mxu0 0.0
    %664 = vmatpush1.msra.mxu0 0.0
    %665 = vmatprep.subr.mxu0 0.0
    %666 = vmatpush1.msra.mxu0 0.0
    %667 = vmatprep.subr.mxu0 0.0
    %668 = vmatpush1.msra.mxu0 0.0
    %669 = vmatprep.subr.mxu0 0.0
    %670 = vmatpush1.msra.mxu0 0.0
    %671 = vmatprep.subr.mxu0 0.0
    %672 = vmatpush1.msra.mxu0 0.0
    %673 = vmatprep.subr.mxu0 0.0
    %674 = vmatpush1.msra.mxu0 0.0
    %675 = vmatprep.subr.mxu0 0.0
    %676 = vmatpush1.msra.mxu0 0.0
    %677 = vmatprep.subr.mxu0 0.0
    %678 = vmatpush1.msra.mxu0 0.0
    %679 = vmatprep.subr.mxu0 0.0
    %680 = vmatpush1.msra.mxu0 0.0
    %681 = vmatprep.subr.mxu0 0.0
    %682 = vmatpush1.msra.mxu0 0.0
    %683 = vmatprep.subr.mxu0 0.0
    %684 = vmatpush1.msra.mxu0 0.0
    %685 = vmatprep.subr.mxu0 0.0
    %686 = vmatpush1.msra.mxu0 0.0
    %687 = vmatprep.subr.mxu0 0.0
    %688 = vmatpush1.msra.mxu0 %v34
    %689 = vmatprep.subr.mxu0 0.0
    %690 = vmatpush1.msra.mxu0 %v33
    %691 = vmatprep.subr.mxu0 0.0
    %692 = vmatpush1.msra.mxu0 %v32
    %693 = vmatprep.subr.mxu0 0.0
    %694 = vmatpush1.msra.mxu0 %v31
    %695 = vmatprep.subr.mxu0 0.0
    %696 = vmatpush2.msra.mxu0 0.0
    %697 = vmatprep.subr.mxu0 0.0
    %698 = vmatpush2.msra.mxu0 0.0
    %699 = vmatprep.subr.mxu0 0.0
    %700 = vmatpush2.msra.mxu0 0.0
    %701 = vmatprep.subr.mxu0 0.0
    %702 = vmatpush2.msra.mxu0 0.0
    %703 = vmatprep.subr.mxu0 0.0
    %704 = vmatpush2.msra.mxu0 0.0
    %705 = vmatprep.subr.mxu0 0.0
    %706 = vmatpush2.msra.mxu0 0.0
    %707 = vmatprep.subr.mxu0 0.0
    %708 = vmatpush2.msra.mxu0 0.0
    %709 = vmatprep.subr.mxu0 0.0
    %710 = vmatpush2.msra.mxu0 0.0
    %711 = vmatprep.subr.mxu0 0.0
    %712 = vmatpush2.msra.mxu0 0.0
    %713 = vmatprep.subr.mxu0 0.0
    %714 = vmatpush2.msra.mxu0 0.0
    %715 = vmatprep.subr.mxu0 0.0
    %716 = vmatpush2.msra.mxu0 0.0
    %717 = vmatprep.subr.mxu0 0.0
    %718 = vmatpush2.msra.mxu0 0.0
    %719 = vmatprep.subr.mxu0 0.0
    %720 = vmatpush2.msra.mxu0 0.0
    %721 = vmatprep.subr.mxu0 0.0
    %722 = vmatpush2.msra.mxu0 0.0
    %723 = vmatprep.subr.mxu0 0.0
    %724 = vmatpush2.msra.mxu0 0.0
    %725 = vmatprep.subr.mxu0 0.0
    %726 = vmatpush2.msra.mxu0 0.0
    %727 = vmatprep.mubr.f32.mxu0 0.0
    %728 = vmatmul.mubr.f32.gmra.mxu0 %v661
    %v729 = vpop.f32.mrf.mxu0
    %v730 = vadd.f32 0.0, %v729
    %v731 = vpop.f32.mrf.mxu0
    %732 = vdwg.mxu0
    %734 = vrot.lane.b32.xlu0 %v730, 32
    %v735 = vpop.permute.xlu0 %734
    %v737 = vadd.f32 %v657, %v735
    %v738 = vtanh.pop %v737
    %v739 = vadd.f32 %v165, %v654
    %v740 = vtanh.pop %v739
    %v742 = vsel %vm188, %v740, 0
    %744 = vmatprep.subr.mxu0 0.0
    %745 = vmatpush1.msra.mxu0 0.0
    %746 = vmatprep.subr.mxu0 0.0
    %747 = vmatpush1.msra.mxu0 0.0
    %748 = vmatprep.subr.mxu0 0.0
    %749 = vmatpush1.msra.mxu0 0.0
    %750 = vmatprep.subr.mxu0 0.0
    %751 = vmatpush1.msra.mxu0 0.0
    %752 = vmatprep.subr.mxu0 0.0
    %753 = vmatpush1.msra.mxu0 0.0
    %754 = vmatprep.subr.mxu0 0.0
    %755 = vmatpush1.msra.mxu0 0.0
    %756 = vmatprep.subr.mxu0 0.0
    %757 = vmatpush1.msra.mxu0 0.0
    %758 = vmatprep.subr.mxu0 0.0
    %759 = vmatpush1.msra.mxu0 0.0
    %760 = vmatprep.subr.mxu0 0.0
    %761 = vmatpush1.msra.mxu0 0.0
    %762 = vmatprep.subr.mxu0 0.0
    %763 = vmatpush1.msra.mxu0 0.0
    %764 = vmatprep.subr.mxu0 0.0
    %765 = vmatpush1.msra.mxu0 0.0
    %766 = vmatprep.subr.mxu0 0.0
    %767 = vmatpush1.msra.mxu0 0.0
    %768 = vmatprep.subr.mxu0 0.0
    %769 = vmatpush1.msra.mxu0 %v44
    %770 = vmatprep.subr.mxu0 0.0
    %771 = vmatpush1.msra.mxu0 %v43
    %772 = vmatprep.subr.mxu0 0.0
    %773 = vmatpush1.msra.mxu0 %v42
    %774 = vmatprep.subr.mxu0 0.0
    %775 = vmatpush1.msra.mxu0 %v41
    %776 = vmatprep.subr.mxu0 0.0
    %777 = vmatpush2.msra.mxu0 0.0
    %778 = vmatprep.subr.mxu0 0.0
    %779 = vmatpush2.msra.mxu0 0.0
    %780 = vmatprep.subr.mxu0 0.0
    %781 = vmatpush2.msra.mxu0 0.0
    %782 = vmatprep.subr.mxu0 0.0
    %783 = vmatpush2.msra.mxu0 0.0
    %784 = vmatprep.subr.mxu0 0.0
    %785 = vmatpush2.msra.mxu0 0.0
    %786 = vmatprep.subr.mxu0 0.0
    %787 = vmatpush2.msra.mxu0 0.0
    %788 = vmatprep.subr.mxu0 0.0
    %789 = vmatpush2.msra.mxu0 0.0
    %790 = vmatprep.subr.mxu0 0.0
    %791 = vmatpush2.msra.mxu0 0.0
    %792 = vmatprep.subr.mxu0 0.0
    %793 = vmatpush2.msra.mxu0 0.0
    %794 = vmatprep.subr.mxu0 0.0
    %795 = vmatpush2.msra.mxu0 0.0
    %796 = vmatprep.subr.mxu0 0.0
    %797 = vmatpush2.msra.mxu0 0.0
    %798 = vmatprep.subr.mxu0 0.0
    %799 = vmatpush2.msra.mxu0 0.0
    %800 = vmatprep.subr.mxu0 0.0
    %801 = vmatpush2.msra.mxu0 0.0
    %802 = vmatprep.subr.mxu0 0.0
    %803 = vmatpush2.msra.mxu0 0.0
    %804 = vmatprep.subr.mxu0 0.0
    %805 = vmatpush2.msra.mxu0 0.0
    %806 = vmatprep.subr.mxu0 0.0
    %807 = vmatpush2.msra.mxu0 0.0
    %808 = vmatprep.mubr.f32.mxu0 0.0
    %809 = vmatmul.mubr.f32.gmra.mxu0 %v742
    %v810 = vpop.f32.mrf.mxu0
    %v811 = vadd.f32 0.0, %v810
    %v812 = vpop.f32.mrf.mxu0
    %813 = vdwg.mxu0
    %v814 = vadd.f32 %v811, %v264
    %816 = vrot.lane.b32.xlu0 %v738, 96
    %v817 = vpop.permute.xlu0 %816
    %v818 = vsel %vm188, %v817, 0
    %820 = vmatprep.subr.mxu0 0.0
    %821 = vmatpush1.msra.mxu0 0.0
    %822 = vmatprep.subr.mxu0 0.0
    %823 = vmatpush1.msra.mxu0 0.0
    %824 = vmatprep.subr.mxu0 0.0
    %825 = vmatpush1.msra.mxu0 0.0
    %826 = vmatprep.subr.mxu0 0.0
    %827 = vmatpush1.msra.mxu0 0.0
    %828 = vmatprep.subr.mxu0 0.0
    %829 = vmatpush1.msra.mxu0 0.0
    %830 = vmatprep.subr.mxu0 0.0
    %831 = vmatpush1.msra.mxu0 0.0
    %832 = vmatprep.subr.mxu0 0.0
    %833 = vmatpush1.msra.mxu0 0.0
    %834 = vmatprep.subr.mxu0 0.0
    %835 = vmatpush1.msra.mxu0 0.0
    %836 = vmatprep.subr.mxu0 0.0
    %837 = vmatpush1.msra.mxu0 0.0
    %838 = vmatprep.subr.mxu0 0.0
    %839 = vmatpush1.msra.mxu0 0.0
    %840 = vmatprep.subr.mxu0 0.0
    %841 = vmatpush1.msra.mxu0 0.0
    %842 = vmatprep.subr.mxu0 0.0
    %843 = vmatpush1.msra.mxu0 0.0
    %844 = vmatprep.subr.mxu0 0.0
    %845 = vmatpush1.msra.mxu0 %v34
    %846 = vmatprep.subr.mxu0 0.0
    %847 = vmatpush1.msra.mxu0 %v33
    %848 = vmatprep.subr.mxu0 0.0
    %849 = vmatpush1.msra.mxu0 %v32
    %850 = vmatprep.subr.mxu0 0.0
    %851 = vmatpush1.msra.mxu0 %v31
    %852 = vmatprep.subr.mxu0 0.0
    %853 = vmatpush2.msra.mxu0 0.0
    %854 = vmatprep.subr.mxu0 0.0
    %855 = vmatpush2.msra.mxu0 0.0
    %856 = vmatprep.subr.mxu0 0.0
    %857 = vmatpush2.msra.mxu0 0.0
    %858 = vmatprep.subr.mxu0 0.0
    %859 = vmatpush2.msra.mxu0 0.0
    %860 = vmatprep.subr.mxu0 0.0
    %861 = vmatpush2.msra.mxu0 0.0
    %862 = vmatprep.subr.mxu0 0.0
    %863 = vmatpush2.msra.mxu0 0.0
    %864 = vmatprep.subr.mxu0 0.0
    %865 = vmatpush2.msra.mxu0 0.0
    %866 = vmatprep.subr.mxu0 0.0
    %867 = vmatpush2.msra.mxu0 0.0
    %868 = vmatprep.subr.mxu0 0.0
    %869 = vmatpush2.msra.mxu0 0.0
    %870 = vmatprep.subr.mxu0 0.0
    %871 = vmatpush2.msra.mxu0 0.0
    %872 = vmatprep.subr.mxu0 0.0
    %873 = vmatpush2.msra.mxu0 0.0
    %874 = vmatprep.subr.mxu0 0.0
    %875 = vmatpush2.msra.mxu0 0.0
    %876 = vmatprep.subr.mxu0 0.0
    %877 = vmatpush2.msra.mxu0 0.0
    %878 = vmatprep.subr.mxu0 0.0
    %879 = vmatpush2.msra.mxu0 0.0
    %880 = vmatprep.subr.mxu0 0.0
    %881 = vmatpush2.msra.mxu0 0.0
    %882 = vmatprep.subr.mxu0 0.0
    %883 = vmatpush2.msra.mxu0 0.0
    %884 = vmatprep.mubr.f32.mxu0 0.0
    %885 = vmatmul.mubr.f32.gmra.mxu0 %v818
    %v886 = vpop.f32.mrf.mxu0
    %v887 = vadd.f32 0.0, %v886
    %v888 = vpop.f32.mrf.mxu0
    %889 = vdwg.mxu0
    %891 = vrot.lane.b32.xlu0 %v887, 32
    %v892 = vpop.permute.xlu0 %891
    %v894 = vadd.f32 %v814, %v892
    %v895 = vtanh.pop %v894
    %v896 = vadd.f32 %v170, %v811
    %v897 = vtanh.pop %v896
    %v899 = vsel %vm188, %v897, 0
    %901 = vmatprep.subr.mxu0 0.0
    %902 = vmatpush1.msra.mxu0 0.0
    %903 = vmatprep.subr.mxu0 0.0
    %904 = vmatpush1.msra.mxu0 0.0
    %905 = vmatprep.subr.mxu0 0.0
    %906 = vmatpush1.msra.mxu0 0.0
    %907 = vmatprep.subr.mxu0 0.0
    %908 = vmatpush1.msra.mxu0 0.0
    %909 = vmatprep.subr.mxu0 0.0
    %910 = vmatpush1.msra.mxu0 0.0
    %911 = vmatprep.subr.mxu0 0.0
    %912 = vmatpush1.msra.mxu0 0.0
    %913 = vmatprep.subr.mxu0 0.0
    %914 = vmatpush1.msra.mxu0 0.0
    %915 = vmatprep.subr.mxu0 0.0
    %916 = vmatpush1.msra.mxu0 0.0
    %917 = vmatprep.subr.mxu0 0.0
    %918 = vmatpush1.msra.mxu0 0.0
    %919 = vmatprep.subr.mxu0 0.0
    %920 = vmatpush1.msra.mxu0 0.0
    %921 = vmatprep.subr.mxu0 0.0
    %922 = vmatpush1.msra.mxu0 0.0
    %923 = vmatprep.subr.mxu0 0.0
    %924 = vmatpush1.msra.mxu0 0.0
    %925 = vmatprep.subr.mxu0 0.0
    %926 = vmatpush1.msra.mxu0 %v44
    %927 = vmatprep.subr.mxu0 0.0
    %928 = vmatpush1.msra.mxu0 %v43
    %929 = vmatprep.subr.mxu0 0.0
    %930 = vmatpush1.msra.mxu0 %v42
    %931 = vmatprep.subr.mxu0 0.0
    %932 = vmatpush1.msra.mxu0 %v41
    %933 = vmatprep.subr.mxu0 0.0
    %934 = vmatpush2.msra.mxu0 0.0
    %935 = vmatprep.subr.mxu0 0.0
    %936 = vmatpush2.msra.mxu0 0.0
    %937 = vmatprep.subr.mxu0 0.0
    %938 = vmatpush2.msra.mxu0 0.0
    %939 = vmatprep.subr.mxu0 0.0
    %940 = vmatpush2.msra.mxu0 0.0
    %941 = vmatprep.subr.mxu0 0.0
    %942 = vmatpush2.msra.mxu0 0.0
    %943 = vmatprep.subr.mxu0 0.0
    %944 = vmatpush2.msra.mxu0 0.0
    %945 = vmatprep.subr.mxu0 0.0
    %946 = vmatpush2.msra.mxu0 0.0
    %947 = vmatprep.subr.mxu0 0.0
    %948 = vmatpush2.msra.mxu0 0.0
    %949 = vmatprep.subr.mxu0 0.0
    %950 = vmatpush2.msra.mxu0 0.0
    %951 = vmatprep.subr.mxu0 0.0
    %952 = vmatpush2.msra.mxu0 0.0
    %953 = vmatprep.subr.mxu0 0.0
    %954 = vmatpush2.msra.mxu0 0.0
    %955 = vmatprep.subr.mxu0 0.0
    %956 = vmatpush2.msra.mxu0 0.0
    %957 = vmatprep.subr.mxu0 0.0
    %958 = vmatpush2.msra.mxu0 0.0
    %959 = vmatprep.subr.mxu0 0.0
    %960 = vmatpush2.msra.mxu0 0.0
    %961 = vmatprep.subr.mxu0 0.0
    %962 = vmatpush2.msra.mxu0 0.0
    %963 = vmatprep.subr.mxu0 0.0
    %964 = vmatpush2.msra.mxu0 0.0
    %965 = vmatprep.mubr.f32.mxu0 0.0
    %966 = vmatmul.mubr.f32.gmra.mxu0 %v899
    %v967 = vpop.f32.mrf.mxu0
    %v968 = vadd.f32 0.0, %v967
    %v969 = vpop.f32.mrf.mxu0
    %970 = vdwg.mxu0
    %v971 = vadd.f32 %v968, %v264
    %973 = vrot.lane.b32.xlu0 %v895, 96
    %v974 = vpop.permute.xlu0 %973
    %v975 = vsel %vm188, %v974, 0
    %977 = vmatprep.subr.mxu0 0.0
    %978 = vmatpush1.msra.mxu0 0.0
    %979 = vmatprep.subr.mxu0 0.0
    %980 = vmatpush1.msra.mxu0 0.0
    %981 = vmatprep.subr.mxu0 0.0
    %982 = vmatpush1.msra.mxu0 0.0
    %983 = vmatprep.subr.mxu0 0.0
    %984 = vmatpush1.msra.mxu0 0.0
    %985 = vmatprep.subr.mxu0 0.0
    %986 = vmatpush1.msra.mxu0 0.0
    %987 = vmatprep.subr.mxu0 0.0
    %988 = vmatpush1.msra.mxu0 0.0
    %989 = vmatprep.subr.mxu0 0.0
    %990 = vmatpush1.msra.mxu0 0.0
    %991 = vmatprep.subr.mxu0 0.0
    %992 = vmatpush1.msra.mxu0 0.0
    %993 = vmatprep.subr.mxu0 0.0
    %994 = vmatpush1.msra.mxu0 0.0
    %995 = vmatprep.subr.mxu0 0.0
    %996 = vmatpush1.msra.mxu0 0.0
    %997 = vmatprep.subr.mxu0 0.0
    %998 = vmatpush1.msra.mxu0 0.0
    %999 = vmatprep.subr.mxu0 0.0
    %1000 = vmatpush1.msra.mxu0 0.0
    %1001 = vmatprep.subr.mxu0 0.0
    %1002 = vmatpush1.msra.mxu0 %v34
    %1003 = vmatprep.subr.mxu0 0.0
    %1004 = vmatpush1.msra.mxu0 %v33
    %1005 = vmatprep.subr.mxu0 0.0
    %1006 = vmatpush1.msra.mxu0 %v32
    %1007 = vmatprep.subr.mxu0 0.0
    %1008 = vmatpush1.msra.mxu0 %v31
    %1009 = vmatprep.subr.mxu0 0.0
    %1010 = vmatpush2.msra.mxu0 0.0
    %1011 = vmatprep.subr.mxu0 0.0
    %1012 = vmatpush2.msra.mxu0 0.0
    %1013 = vmatprep.subr.mxu0 0.0
    %1014 = vmatpush2.msra.mxu0 0.0
    %1015 = vmatprep.subr.mxu0 0.0
    %1016 = vmatpush2.msra.mxu0 0.0
    %1017 = vmatprep.subr.mxu0 0.0
    %1018 = vmatpush2.msra.mxu0 0.0
    %1019 = vmatprep.subr.mxu0 0.0
    %1020 = vmatpush2.msra.mxu0 0.0
    %1021 = vmatprep.subr.mxu0 0.0
    %1022 = vmatpush2.msra.mxu0 0.0
    %1023 = vmatprep.subr.mxu0 0.0
    %1024 = vmatpush2.msra.mxu0 0.0
    %1025 = vmatprep.subr.mxu0 0.0
    %1026 = vmatpush2.msra.mxu0 0.0
    %1027 = vmatprep.subr.mxu0 0.0
    %1028 = vmatpush2.msra.mxu0 0.0
    %1029 = vmatprep.subr.mxu0 0.0
    %1030 = vmatpush2.msra.mxu0 0.0
    %1031 = vmatprep.subr.mxu0 0.0
    %1032 = vmatpush2.msra.mxu0 0.0
    %1033 = vmatprep.subr.mxu0 0.0
    %1034 = vmatpush2.msra.mxu0 0.0
    %1035 = vmatprep.subr.mxu0 0.0
    %1036 = vmatpush2.msra.mxu0 0.0
    %1037 = vmatprep.subr.mxu0 0.0
    %1038 = vmatpush2.msra.mxu0 0.0
    %1039 = vmatprep.subr.mxu0 0.0
    %1040 = vmatpush2.msra.mxu0 0.0
    %1041 = vmatprep.mubr.f32.mxu0 0.0
    %1042 = vmatmul.mubr.f32.gmra.mxu0 %v975
    %v1043 = vpop.f32.mrf.mxu0
    %v1044 = vadd.f32 0.0, %v1043
    %v1045 = vpop.f32.mrf.mxu0
    %1046 = vdwg.mxu0
    %1048 = vrot.lane.b32.xlu0 %v1044, 32
    %v1049 = vpop.permute.xlu0 %1048
    %v1051 = vadd.f32 %v971, %v1049
    %v1052 = vtanh.pop %v1051
    %v1053 = vadd.f32 %v175, %v968
    %v1054 = vtanh.pop %v1053
    %v1056 = vsel %vm188, %v1054, 0
    %1058 = vmatprep.subr.mxu0 0.0
    %1059 = vmatpush1.msra.mxu0 0.0
    %1060 = vmatprep.subr.mxu0 0.0
    %1061 = vmatpush1.msra.mxu0 0.0
    %1062 = vmatprep.subr.mxu0 0.0
    %1063 = vmatpush1.msra.mxu0 0.0
    %1064 = vmatprep.subr.mxu0 0.0
    %1065 = vmatpush1.msra.mxu0 0.0
    %1066 = vmatprep.subr.mxu0 0.0
    %1067 = vmatpush1.msra.mxu0 0.0
    %1068 = vmatprep.subr.mxu0 0.0
    %1069 = vmatpush1.msra.mxu0 0.0
    %1070 = vmatprep.subr.mxu0 0.0
    %1071 = vmatpush1.msra.mxu0 0.0
    %1072 = vmatprep.subr.mxu0 0.0
    %1073 = vmatpush1.msra.mxu0 0.0
    %1074 = vmatprep.subr.mxu0 0.0
    %1075 = vmatpush1.msra.mxu0 0.0
    %1076 = vmatprep.subr.mxu0 0.0
    %1077 = vmatpush1.msra.mxu0 0.0
    %1078 = vmatprep.subr.mxu0 0.0
    %1079 = vmatpush1.msra.mxu0 0.0
    %1080 = vmatprep.subr.mxu0 0.0
    %1081 = vmatpush1.msra.mxu0 0.0
    %1082 = vmatprep.subr.mxu0 0.0
    %1083 = vmatpush1.msra.mxu0 %v44
    %1084 = vmatprep.subr.mxu0 0.0
    %1085 = vmatpush1.msra.mxu0 %v43
    %1086 = vmatprep.subr.mxu0 0.0
    %1087 = vmatpush1.msra.mxu0 %v42
    %1088 = vmatprep.subr.mxu0 0.0
    %1089 = vmatpush1.msra.mxu0 %v41
    %1090 = vmatprep.subr.mxu0 0.0
    %1091 = vmatpush2.msra.mxu0 0.0
    %1092 = vmatprep.subr.mxu0 0.0
    %1093 = vmatpush2.msra.mxu0 0.0
    %1094 = vmatprep.subr.mxu0 0.0
    %1095 = vmatpush2.msra.mxu0 0.0
    %1096 = vmatprep.subr.mxu0 0.0
    %1097 = vmatpush2.msra.mxu0 0.0
    %1098 = vmatprep.subr.mxu0 0.0
    %1099 = vmatpush2.msra.mxu0 0.0
    %1100 = vmatprep.subr.mxu0 0.0
    %1101 = vmatpush2.msra.mxu0 0.0
    %1102 = vmatprep.subr.mxu0 0.0
    %1103 = vmatpush2.msra.mxu0 0.0
    %1104 = vmatprep.subr.mxu0 0.0
    %1105 = vmatpush2.msra.mxu0 0.0
    %1106 = vmatprep.subr.mxu0 0.0
    %1107 = vmatpush2.msra.mxu0 0.0
    %1108 = vmatprep.subr.mxu0 0.0
    %1109 = vmatpush2.msra.mxu0 0.0
    %1110 = vmatprep.subr.mxu0 0.0
    %1111 = vmatpush2.msra.mxu0 0.0
    %1112 = vmatprep.subr.mxu0 0.0
    %1113 = vmatpush2.msra.mxu0 0.0
    %1114 = vmatprep.subr.mxu0 0.0
    %1115 = vmatpush2.msra.mxu0 0.0
    %1116 = vmatprep.subr.mxu0 0.0
    %1117 = vmatpush2.msra.mxu0 0.0
    %1118 = vmatprep.subr.mxu0 0.0
    %1119 = vmatpush2.msra.mxu0 0.0
    %1120 = vmatprep.subr.mxu0 0.0
    %1121 = vmatpush2.msra.mxu0 0.0
    %1122 = vmatprep.mubr.f32.mxu0 0.0
    %1123 = vmatmul.mubr.f32.gmra.mxu0 %v1056
    %v1124 = vpop.f32.mrf.mxu0
    %v1125 = vadd.f32 0.0, %v1124
    %v1126 = vpop.f32.mrf.mxu0
    %1127 = vdwg.mxu0
    %v1128 = vadd.f32 %v1125, %v264
    %1130 = vrot.lane.b32.xlu0 %v1052, 96
    %v1131 = vpop.permute.xlu0 %1130
    %v1132 = vsel %vm188, %v1131, 0
    %1134 = vmatprep.subr.mxu0 0.0
    %1135 = vmatpush1.msra.mxu0 0.0
    %1136 = vmatprep.subr.mxu0 0.0
    %1137 = vmatpush1.msra.mxu0 0.0
    %1138 = vmatprep.subr.mxu0 0.0
    %1139 = vmatpush1.msra.mxu0 0.0
    %1140 = vmatprep.subr.mxu0 0.0
    %1141 = vmatpush1.msra.mxu0 0.0
    %1142 = vmatprep.subr.mxu0 0.0
    %1143 = vmatpush1.msra.mxu0 0.0
    %1144 = vmatprep.subr.mxu0 0.0
    %1145 = vmatpush1.msra.mxu0 0.0
    %1146 = vmatprep.subr.mxu0 0.0
    %1147 = vmatpush1.msra.mxu0 0.0
    %1148 = vmatprep.subr.mxu0 0.0
    %1149 = vmatpush1.msra.mxu0 0.0
    %1150 = vmatprep.subr.mxu0 0.0
    %1151 = vmatpush1.msra.mxu0 0.0
    %1152 = vmatprep.subr.mxu0 0.0
    %1153 = vmatpush1.msra.mxu0 0.0
    %1154 = vmatprep.subr.mxu0 0.0
    %1155 = vmatpush1.msra.mxu0 0.0
    %1156 = vmatprep.subr.mxu0 0.0
    %1157 = vmatpush1.msra.mxu0 0.0
    %1158 = vmatprep.subr.mxu0 0.0
    %1159 = vmatpush1.msra.mxu0 %v34
    %1160 = vmatprep.subr.mxu0 0.0
    %1161 = vmatpush1.msra.mxu0 %v33
    %1162 = vmatprep.subr.mxu0 0.0
    %1163 = vmatpush1.msra.mxu0 %v32
    %1164 = vmatprep.subr.mxu0 0.0
    %1165 = vmatpush1.msra.mxu0 %v31
    %1166 = vmatprep.subr.mxu0 0.0
    %1167 = vmatpush2.msra.mxu0 0.0
    %1168 = vmatprep.subr.mxu0 0.0
    %1169 = vmatpush2.msra.mxu0 0.0
    %1170 = vmatprep.subr.mxu0 0.0
    %1171 = vmatpush2.msra.mxu0 0.0
    %1172 = vmatprep.subr.mxu0 0.0
    %1173 = vmatpush2.msra.mxu0 0.0
    %1174 = vmatprep.subr.mxu0 0.0
    %1175 = vmatpush2.msra.mxu0 0.0
    %1176 = vmatprep.subr.mxu0 0.0
    %1177 = vmatpush2.msra.mxu0 0.0
    %1178 = vmatprep.subr.mxu0 0.0
    %1179 = vmatpush2.msra.mxu0 0.0
    %1180 = vmatprep.subr.mxu0 0.0
    %1181 = vmatpush2.msra.mxu0 0.0
    %1182 = vmatprep.subr.mxu0 0.0
    %1183 = vmatpush2.msra.mxu0 0.0
    %1184 = vmatprep.subr.mxu0 0.0
    %1185 = vmatpush2.msra.mxu0 0.0
    %1186 = vmatprep.subr.mxu0 0.0
    %1187 = vmatpush2.msra.mxu0 0.0
    %1188 = vmatprep.subr.mxu0 0.0
    %1189 = vmatpush2.msra.mxu0 0.0
    %1190 = vmatprep.subr.mxu0 0.0
    %1191 = vmatpush2.msra.mxu0 0.0
    %1192 = vmatprep.subr.mxu0 0.0
    %1193 = vmatpush2.msra.mxu0 0.0
    %1194 = vmatprep.subr.mxu0 0.0
    %1195 = vmatpush2.msra.mxu0 0.0
    %1196 = vmatprep.subr.mxu0 0.0
    %1197 = vmatpush2.msra.mxu0 0.0
    %1198 = vmatprep.mubr.f32.mxu0 0.0
    %1199 = vmatmul.mubr.f32.gmra.mxu0 %v1132
    %v1200 = vpop.f32.mrf.mxu0
    %v1201 = vadd.f32 0.0, %v1200
    %v1202 = vpop.f32.mrf.mxu0
    %1203 = vdwg.mxu0
    %1205 = vrot.lane.b32.xlu0 %v1201, 32
    %v1206 = vpop.permute.xlu0 %1205
    %v1208 = vadd.f32 %v1128, %v1206
    %v1209 = vtanh.pop %v1208
    %v1210 = vadd.f32 %v180, %v1125
    %v1211 = vtanh.pop %v1210
    %1216 = vrot.lane.b32.xlu0 %v41, 96
    %v1217 = vpop.permute.xlu0 %1216
    %1218 = vrot.lane.b32.xlu0 %v42, 96
    %v1219 = vpop.permute.xlu0 %1218
    %1220 = vrot.lane.b32.xlu0 %v43, 96
    %v1221 = vpop.permute.xlu0 %1220
    %1222 = vrot.lane.b32.xlu0 %v44, 96
    %v1223 = vpop.permute.xlu0 %1222
    %v1229 = vsel %vm188, %v1211, 0
    %1231 = vmatprep.subr.mxu0 0.0
    %1232 = vmatpush1.msra.mxu0 0.0
    %1233 = vmatprep.subr.mxu0 0.0
    %1234 = vmatpush1.msra.mxu0 0.0
    %1235 = vmatprep.subr.mxu0 0.0
    %1236 = vmatpush1.msra.mxu0 0.0
    %1237 = vmatprep.subr.mxu0 0.0
    %1238 = vmatpush1.msra.mxu0 0.0
    %1239 = vmatprep.subr.mxu0 0.0
    %1240 = vmatpush1.msra.mxu0 0.0
    %1241 = vmatprep.subr.mxu0 0.0
    %1242 = vmatpush1.msra.mxu0 0.0
    %1243 = vmatprep.subr.mxu0 0.0
    %1244 = vmatpush1.msra.mxu0 0.0
    %1245 = vmatprep.subr.mxu0 0.0
    %1246 = vmatpush1.msra.mxu0 0.0
    %1247 = vmatprep.subr.mxu0 0.0
    %1248 = vmatpush1.msra.mxu0 0.0
    %1249 = vmatprep.subr.mxu0 0.0
    %1250 = vmatpush1.msra.mxu0 0.0
    %1251 = vmatprep.subr.mxu0 0.0
    %1252 = vmatpush1.msra.mxu0 0.0
    %1253 = vmatprep.subr.mxu0 0.0
    %1254 = vmatpush1.msra.mxu0 0.0
    %1255 = vmatprep.subr.mxu0 0.0
    %1256 = vmatpush1.msra.mxu0 %v1223
    %1257 = vmatprep.subr.mxu0 0.0
    %1258 = vmatpush1.msra.mxu0 %v1221
    %1259 = vmatprep.subr.mxu0 0.0
    %1260 = vmatpush1.msra.mxu0 %v1219
    %1261 = vmatprep.subr.mxu0 0.0
    %1262 = vmatpush1.msra.mxu0 %v1217
    %1263 = vmatprep.subr.mxu0 0.0
    %1264 = vmatpush2.msra.mxu0 0.0
    %1265 = vmatprep.subr.mxu0 0.0
    %1266 = vmatpush2.msra.mxu0 0.0
    %1267 = vmatprep.subr.mxu0 0.0
    %1268 = vmatpush2.msra.mxu0 0.0
    %1269 = vmatprep.subr.mxu0 0.0
    %1270 = vmatpush2.msra.mxu0 0.0
    %1271 = vmatprep.subr.mxu0 0.0
    %1272 = vmatpush2.msra.mxu0 0.0
    %1273 = vmatprep.subr.mxu0 0.0
    %1274 = vmatpush2.msra.mxu0 0.0
    %1275 = vmatprep.subr.mxu0 0.0
    %1276 = vmatpush2.msra.mxu0 0.0
    %1277 = vmatprep.subr.mxu0 0.0
    %1278 = vmatpush2.msra.mxu0 0.0
    %1279 = vmatprep.subr.mxu0 0.0
    %1280 = vmatpush2.msra.mxu0 0.0
    %1281 = vmatprep.subr.mxu0 0.0
    %1282 = vmatpush2.msra.mxu0 0.0
    %1283 = vmatprep.subr.mxu0 0.0
    %1284 = vmatpush2.msra.mxu0 0.0
    %1285 = vmatprep.subr.mxu0 0.0
    %1286 = vmatpush2.msra.mxu0 0.0
    %1287 = vmatprep.subr.mxu0 0.0
    %1288 = vmatpush2.msra.mxu0 0.0
    %1289 = vmatprep.subr.mxu0 0.0
    %1290 = vmatpush2.msra.mxu0 0.0
    %1291 = vmatprep.subr.mxu0 0.0
    %1292 = vmatpush2.msra.mxu0 0.0
    %1293 = vmatprep.subr.mxu0 0.0
    %1294 = vmatpush2.msra.mxu0 0.0
    %1295 = vmatprep.mubr.f32.mxu0 0.0
    %1296 = vmatmul.mubr.f32.gmra.mxu0 %v1229
    %v1297 = vpop.f32.mrf.mxu0
    %v1298 = vadd.f32 %v186, %v1297
    %v1299 = vpop.f32.mrf.mxu0
    %1300 = vdwg.mxu0
    %1302 = vrot.lane.b32.xlu0 %v1209, 96
    %v1303 = vpop.permute.xlu0 %1302
    %v1304 = vsel %vm188, %v1303, 0
    %1306 = vmatprep.subr.mxu0 0.0
    %1307 = vmatpush1.msra.mxu0 0.0
    %1308 = vmatprep.subr.mxu0 0.0
    %1309 = vmatpush1.msra.mxu0 0.0
    %1310 = vmatprep.subr.mxu0 0.0
    %1311 = vmatpush1.msra.mxu0 0.0
    %1312 = vmatprep.subr.mxu0 0.0
    %1313 = vmatpush1.msra.mxu0 0.0
    %1314 = vmatprep.subr.mxu0 0.0
    %1315 = vmatpush1.msra.mxu0 0.0
    %1316 = vmatprep.subr.mxu0 0.0
    %1317 = vmatpush1.msra.mxu0 0.0
    %1318 = vmatprep.subr.mxu0 0.0
    %1319 = vmatpush1.msra.mxu0 0.0
    %1320 = vmatprep.subr.mxu0 0.0
    %1321 = vmatpush1.msra.mxu0 0.0
    %1322 = vmatprep.subr.mxu0 0.0
    %1323 = vmatpush1.msra.mxu0 0.0
    %1324 = vmatprep.subr.mxu0 0.0
    %1325 = vmatpush1.msra.mxu0 0.0
    %1326 = vmatprep.subr.mxu0 0.0
    %1327 = vmatpush1.msra.mxu0 0.0
    %1328 = vmatprep.subr.mxu0 0.0
    %1329 = vmatpush1.msra.mxu0 0.0
    %1330 = vmatprep.subr.mxu0 0.0
    %1331 = vmatpush1.msra.mxu0 %v34
    %1332 = vmatprep.subr.mxu0 0.0
    %1333 = vmatpush1.msra.mxu0 %v33
    %1334 = vmatprep.subr.mxu0 0.0
    %1335 = vmatpush1.msra.mxu0 %v32
    %1336 = vmatprep.subr.mxu0 0.0
    %1337 = vmatpush1.msra.mxu0 %v31
    %1338 = vmatprep.subr.mxu0 0.0
    %1339 = vmatpush2.msra.mxu0 0.0
    %1340 = vmatprep.subr.mxu0 0.0
    %1341 = vmatpush2.msra.mxu0 0.0
    %1342 = vmatprep.subr.mxu0 0.0
    %1343 = vmatpush2.msra.mxu0 0.0
    %1344 = vmatprep.subr.mxu0 0.0
    %1345 = vmatpush2.msra.mxu0 0.0
    %1346 = vmatprep.subr.mxu0 0.0
    %1347 = vmatpush2.msra.mxu0 0.0
    %1348 = vmatprep.subr.mxu0 0.0
    %1349 = vmatpush2.msra.mxu0 0.0
    %1350 = vmatprep.subr.mxu0 0.0
    %1351 = vmatpush2.msra.mxu0 0.0
    %1352 = vmatprep.subr.mxu0 0.0
    %1353 = vmatpush2.msra.mxu0 0.0
    %1354 = vmatprep.subr.mxu0 0.0
    %1355 = vmatpush2.msra.mxu0 0.0
    %1356 = vmatprep.subr.mxu0 0.0
    %1357 = vmatpush2.msra.mxu0 0.0
    %1358 = vmatprep.subr.mxu0 0.0
    %1359 = vmatpush2.msra.mxu0 0.0
    %1360 = vmatprep.subr.mxu0 0.0
    %1361 = vmatpush2.msra.mxu0 0.0
    %1362 = vmatprep.subr.mxu0 0.0
    %1363 = vmatpush2.msra.mxu0 0.0
    %1364 = vmatprep.subr.mxu0 0.0
    %1365 = vmatpush2.msra.mxu0 0.0
    %1366 = vmatprep.subr.mxu0 0.0
    %1367 = vmatpush2.msra.mxu0 0.0
    %1368 = vmatprep.subr.mxu0 0.0
    %1369 = vmatpush2.msra.mxu0 0.0
    %1370 = vmatprep.mubr.f32.mxu0 0.0
    %1371 = vmatmul.mubr.f32.gmra.mxu0 %v1304
    %v1372 = vpop.f32.mrf.mxu0
    %v1373 = vadd.f32 0.0, %v1372
    %v1374 = vpop.f32.mrf.mxu0
    %1375 = vdwg.mxu0
    %v1376 = vadd.f32 %v1298, %v1373
    %v1377 = vtanh.pop %v1376
    %v1378 = vsel %vm188, %v1377, 0.0
    %1379 = vadd.xlane.f32.xlu0 %v1378
    %v1380 = vpop.xlane.xlu0 %1379
    %v1381 = vrcp.pop 32.0
    %v1382 = vmul.f32 %v1380, %v1381
    %v1383 = vsub.f32 %v1377, %v1382
    %v1384 = vmul.f32 %v1383, %v1383
    %v1385 = vsel %vm188, %v1384, 0.0
    %1386 = vadd.xlane.f32.xlu0 %v1385
    %v1387 = vpop.xlane.xlu0 %1386
    %v1388 = vmul.f32 %v1387, %v1381
    %v1389 = vadd.f32 %v1388, 1e-05
    %v1390 = vrsqrt.pop %v1389
    %v1391 = vmul.f32 %v1383, %v1390
    %v1392 = vlaneseq
    %v1393 = vshrl.u32 %v1392, 7
    %v1394 = vsub.s32 2, %v1393
    %v1395 = vrot.slane %v40, %v1394
    %v1396 = vmul.f32 %v1391, %v1395
    %v1397 = vlaneseq
    %v1398 = vshrl.u32 %v1397, 7
    %v1399 = vsub.s32 3, %v1398
    %v1400 = vrot.slane %v40, %v1399
    %v1401 = vadd.f32 %v1396, %v1400
    %vm1402 = vcmask 48128
    %v1404 = vsel %vm1402, %v29, 0
    %vm1406 = vcmask 1045504
    %v1408 = vsel %vm1406, %v39, 0
    %1410 = vmatprep.subr.mxu0 0.0
    %1411 = vmatpush1.msra.mxu0 0.0
    %1412 = vmatprep.subr.mxu0 0.0
    %1413 = vmatpush1.msra.mxu0 0.0
    %1414 = vmatprep.subr.mxu0 0.0
    %1415 = vmatpush1.msra.mxu0 0.0
    %1416 = vmatprep.subr.mxu0 0.0
    %1417 = vmatpush1.msra.mxu0 0.0
    %1418 = vmatprep.subr.mxu0 0.0
    %1419 = vmatpush1.msra.mxu0 0.0
    %1420 = vmatprep.subr.mxu0 0.0
    %1421 = vmatpush1.msra.mxu0 0.0
    %1422 = vmatprep.subr.mxu0 0.0
    %1423 = vmatpush1.msra.mxu0 0.0
    %1424 = vmatprep.subr.mxu0 0.0
    %1425 = vmatpush1.msra.mxu0 0.0
    %1426 = vmatprep.subr.mxu0 0.0
    %1427 = vmatpush1.msra.mxu0 0.0
    %1428 = vmatprep.subr.mxu0 0.0
    %1429 = vmatpush1.msra.mxu0 0.0
    %1430 = vmatprep.subr.mxu0 0.0
    %1431 = vmatpush1.msra.mxu0 0.0
    %1432 = vmatprep.subr.mxu0 0.0
    %1433 = vmatpush1.msra.mxu0 0.0
    %1434 = vmatprep.subr.mxu0 0.0
    %1435 = vmatpush1.msra.mxu0 0.0
    %1436 = vmatprep.subr.mxu0 0.0
    %1437 = vmatpush1.msra.mxu0 0.0
    %1438 = vmatprep.subr.mxu0 0.0
    %1439 = vmatpush1.msra.mxu0 0.0
    %1440 = vmatprep.subr.mxu0 0.0
    %1441 = vmatpush1.msra.mxu0 %v1408
    %1442 = vmatprep.subr.mxu0 0.0
    %1443 = vmatpush2.msra.mxu0 0.0
    %1444 = vmatprep.subr.mxu0 0.0
    %1445 = vmatpush2.msra.mxu0 0.0
    %1446 = vmatprep.subr.mxu0 0.0
    %1447 = vmatpush2.msra.mxu0 0.0
    %1448 = vmatprep.subr.mxu0 0.0
    %1449 = vmatpush2.msra.mxu0 0.0
    %1450 = vmatprep.subr.mxu0 0.0
    %1451 = vmatpush2.msra.mxu0 0.0
    %1452 = vmatprep.subr.mxu0 0.0
    %1453 = vmatpush2.msra.mxu0 0.0
    %1454 = vmatprep.subr.mxu0 0.0
    %1455 = vmatpush2.msra.mxu0 0.0
    %1456 = vmatprep.subr.mxu0 0.0
    %1457 = vmatpush2.msra.mxu0 0.0
    %1458 = vmatprep.subr.mxu0 0.0
    %1459 = vmatpush2.msra.mxu0 0.0
    %1460 = vmatprep.subr.mxu0 0.0
    %1461 = vmatpush2.msra.mxu0 0.0
    %1462 = vmatprep.subr.mxu0 0.0
    %1463 = vmatpush2.msra.mxu0 0.0
    %1464 = vmatprep.subr.mxu0 0.0
    %1465 = vmatpush2.msra.mxu0 0.0
    %1466 = vmatprep.subr.mxu0 0.0
    %1467 = vmatpush2.msra.mxu0 0.0
    %1468 = vmatprep.subr.mxu0 0.0
    %1469 = vmatpush2.msra.mxu0 0.0
    %1470 = vmatprep.subr.mxu0 0.0
    %1471 = vmatpush2.msra.mxu0 0.0
    %1472 = vmatprep.subr.mxu0 0.0
    %1473 = vmatpush2.msra.mxu0 0.0
    %1474 = vmatprep.mubr.f32.mxu0 0.0
    %1475 = vmatmul.mubr.f32.gmra.mxu0 %v1404
    %v1476 = vpop.f32.mrf.mxu0
    %v1477 = vadd.f32 0.0, %v1476
    %v1478 = vpop.f32.mrf.mxu0
    %1479 = vdwg.mxu0
    %v1481 = vsel %vm188, %v1401, 0
    %1483 = vmatprep.subr.mxu0 0.0
    %1484 = vmatpush1.msra.mxu0 0.0
    %1485 = vmatprep.subr.mxu0 0.0
    %1486 = vmatpush1.msra.mxu0 0.0
    %1487 = vmatprep.subr.mxu0 0.0
    %1488 = vmatpush1.msra.mxu0 0.0
    %1489 = vmatprep.subr.mxu0 0.0
    %1490 = vmatpush1.msra.mxu0 0.0
    %1491 = vmatprep.subr.mxu0 0.0
    %1492 = vmatpush1.msra.mxu0 0.0
    %1493 = vmatprep.subr.mxu0 0.0
    %1494 = vmatpush1.msra.mxu0 0.0
    %1495 = vmatprep.subr.mxu0 0.0
    %1496 = vmatpush1.msra.mxu0 0.0
    %1497 = vmatprep.subr.mxu0 0.0
    %1498 = vmatpush1.msra.mxu0 0.0
    %1499 = vmatprep.subr.mxu0 0.0
    %1500 = vmatpush1.msra.mxu0 0.0
    %1501 = vmatprep.subr.mxu0 0.0
    %1502 = vmatpush1.msra.mxu0 0.0
    %1503 = vmatprep.subr.mxu0 0.0
    %1504 = vmatpush1.msra.mxu0 0.0
    %1505 = vmatprep.subr.mxu0 0.0
    %1506 = vmatpush1.msra.mxu0 0.0
    %1507 = vmatprep.subr.mxu0 0.0
    %1508 = vmatpush1.msra.mxu0 %v38
    %1509 = vmatprep.subr.mxu0 0.0
    %1510 = vmatpush1.msra.mxu0 %v37
    %1511 = vmatprep.subr.mxu0 0.0
    %1512 = vmatpush1.msra.mxu0 %v36
    %1513 = vmatprep.subr.mxu0 0.0
    %1514 = vmatpush1.msra.mxu0 %v35
    %1515 = vmatprep.subr.mxu0 0.0
    %1516 = vmatpush2.msra.mxu0 0.0
    %1517 = vmatprep.subr.mxu0 0.0
    %1518 = vmatpush2.msra.mxu0 0.0
    %1519 = vmatprep.subr.mxu0 0.0
    %1520 = vmatpush2.msra.mxu0 0.0
    %1521 = vmatprep.subr.mxu0 0.0
    %1522 = vmatpush2.msra.mxu0 0.0
    %1523 = vmatprep.subr.mxu0 0.0
    %1524 = vmatpush2.msra.mxu0 0.0
    %1525 = vmatprep.subr.mxu0 0.0
    %1526 = vmatpush2.msra.mxu0 0.0
    %1527 = vmatprep.subr.mxu0 0.0
    %1528 = vmatpush2.msra.mxu0 0.0
    %1529 = vmatprep.subr.mxu0 0.0
    %1530 = vmatpush2.msra.mxu0 0.0
    %1531 = vmatprep.subr.mxu0 0.0
    %1532 = vmatpush2.msra.mxu0 0.0
    %1533 = vmatprep.subr.mxu0 0.0
    %1534 = vmatpush2.msra.mxu0 0.0
    %1535 = vmatprep.subr.mxu0 0.0
    %1536 = vmatpush2.msra.mxu0 0.0
    %1537 = vmatprep.subr.mxu0 0.0
    %1538 = vmatpush2.msra.mxu0 0.0
    %1539 = vmatprep.subr.mxu0 0.0
    %1540 = vmatpush2.msra.mxu0 0.0
    %1541 = vmatprep.subr.mxu0 0.0
    %1542 = vmatpush2.msra.mxu0 0.0
    %1543 = vmatprep.subr.mxu0 0.0
    %1544 = vmatpush2.msra.mxu0 0.0
    %1545 = vmatprep.subr.mxu0 0.0
    %1546 = vmatpush2.msra.mxu0 0.0
    %1547 = vmatprep.mubr.f32.mxu0 0.0
    %1548 = vmatmul.mubr.f32.gmra.mxu0 %v1481
    %v1549 = vpop.f32.mrf.mxu0
    %v1550 = vadd.f32 %v1477, %v1549
    %v1551 = vpop.f32.mrf.mxu0
    %1552 = vdwg.mxu0
    %v1553 = vlaneseq
    %v1554 = vshrl.u32 %v1553, 7
    %v1555 = vsub.s32 4, %v1554
    %v1556 = vrot.slane %v40, %v1555
    %v1557 = vadd.f32 %v1550, %v1556
    %v1558 = vmax.f32 %v1557, 0.0
    %v1559 = vld [vmem:[%s4] sm:$0xff]
    %v1560 = vld [vmem:[%s4 + $0x8] sm:$0xff]
    %v1561 = vld [vmem:[%s4 + $0x10] sm:$0xff]
    %v1562 = vld [vmem:[%s4 + $0x18] sm:$0xff]
    %v1563 = vld [vmem:[%s4 + $0x20] sm:$0x1]
    %v1564 = vlaneseq
    %v1565 = vshrl.u32 %v1564, 7
    %v1566 = vsub.s32 0, %v1565
    %v1567 = vrot.slane %v1563, %v1566
    %v1569 = vsel %vm188, %v1558, 0
    %1571 = vmatprep.subr.mxu0 0.0
    %1572 = vmatpush1.msra.mxu0 0.0
    %1573 = vmatprep.subr.mxu0 0.0
    %1574 = vmatpush1.msra.mxu0 0.0
    %1575 = vmatprep.subr.mxu0 0.0
    %1576 = vmatpush1.msra.mxu0 0.0
    %1577 = vmatprep.subr.mxu0 0.0
    %1578 = vmatpush1.msra.mxu0 0.0
    %1579 = vmatprep.subr.mxu0 0.0
    %1580 = vmatpush1.msra.mxu0 0.0
    %1581 = vmatprep.subr.mxu0 0.0
    %1582 = vmatpush1.msra.mxu0 0.0
    %1583 = vmatprep.subr.mxu0 0.0
    %1584 = vmatpush1.msra.mxu0 0.0
    %1585 = vmatprep.subr.mxu0 0.0
    %1586 = vmatpush1.msra.mxu0 0.0
    %1587 = vmatprep.subr.mxu0 0.0
    %1588 = vmatpush1.msra.mxu0 0.0
    %1589 = vmatprep.subr.mxu0 0.0
    %1590 = vmatpush1.msra.mxu0 0.0
    %1591 = vmatprep.subr.mxu0 0.0
    %1592 = vmatpush1.msra.mxu0 0.0
    %1593 = vmatprep.subr.mxu0 0.0
    %1594 = vmatpush1.msra.mxu0 0.0
    %1595 = vmatprep.subr.mxu0 0.0
    %1596 = vmatpush1.msra.mxu0 %v1562
    %1597 = vmatprep.subr.mxu0 0.0
    %1598 = vmatpush1.msra.mxu0 %v1561
    %1599 = vmatprep.subr.mxu0 0.0
    %1600 = vmatpush1.msra.mxu0 %v1560
    %1601 = vmatprep.subr.mxu0 0.0
    %1602 = vmatpush1.msra.mxu0 %v1559
    %1603 = vmatprep.subr.mxu0 0.0
    %1604 = vmatpush2.msra.mxu0 0.0
    %1605 = vmatprep.subr.mxu0 0.0
    %1606 = vmatpush2.msra.mxu0 0.0
    %1607 = vmatprep.subr.mxu0 0.0
    %1608 = vmatpush2.msra.mxu0 0.0
    %1609 = vmatprep.subr.mxu0 0.0
    %1610 = vmatpush2.msra.mxu0 0.0
    %1611 = vmatprep.subr.mxu0 0.0
    %1612 = vmatpush2.msra.mxu0 0.0
    %1613 = vmatprep.subr.mxu0 0.0
    %1614 = vmatpush2.msra.mxu0 0.0
    %1615 = vmatprep.subr.mxu0 0.0
    %1616 = vmatpush2.msra.mxu0 0.0
    %1617 = vmatprep.subr.mxu0 0.0
    %1618 = vmatpush2.msra.mxu0 0.0
    %1619 = vmatprep.subr.mxu0 0.0
    %1620 = vmatpush2.msra.mxu0 0.0
    %1621 = vmatprep.subr.mxu0 0.0
    %1622 = vmatpush2.msra.mxu0 0.0
    %1623 = vmatprep.subr.mxu0 0.0
    %1624 = vmatpush2.msra.mxu0 0.0
    %1625 = vmatprep.subr.mxu0 0.0
    %1626 = vmatpush2.msra.mxu0 0.0
    %1627 = vmatprep.subr.mxu0 0.0
    %1628 = vmatpush2.msra.mxu0 0.0
    %1629 = vmatprep.subr.mxu0 0.0
    %1630 = vmatpush2.msra.mxu0 0.0
    %1631 = vmatprep.subr.mxu0 0.0
    %1632 = vmatpush2.msra.mxu0 0.0
    %1633 = vmatprep.subr.mxu0 0.0
    %1634 = vmatpush2.msra.mxu0 0.0
    %1635 = vmatprep.mubr.f32.mxu0 0.0
    %1636 = vmatmul.mubr.f32.gmra.mxu0 %v1569
    %v1637 = vpop.f32.mrf.mxu0
    %v1638 = vadd.f32 %v1567, %v1637
    %v1639 = vpop.f32.mrf.mxu0
    %1640 = vdwg.mxu0
    %vm1641 = vcmask 41984
    %v1642 = vsel %vm1641, %v1638, -inf
    %1643 = vmax.xlane.f32.xlu0 %v1642
    %v1644 = vpop.xlane.xlu0 %1643
    %v1645 = vsub.f32 %v1638, %v1644
    %v1646 = vmul.f32 %v1645, 1.442695
    %v1647 = vpow.pop %v1646
    %v1648 = vsel %vm1641, %v1647, 0.0
    %1649 = vadd.xlane.f32.xlu0 %v1648
    %v1650 = vpop.xlane.xlu0 %1649
    %v1651 = vrcp.pop %v1650
    %v1652 = vmul.f32 %v1647, %v1651
    %1653 = vst.msk [vmem:[#allocation2] sm:$0x3] %vm1641, %v1652
    // Predicated region
    $region22: #{prediction_model_forward.1} parent=1 // pred_check
      _
    $region23: #{prediction_model_forward.1} parent=1 // pred_check_branch
      %1655 = sbr.rel (0) target = $region25
    $region24: #{prediction_model_forward.1} parent=1 // pred_region
      %s1657 = ssub.s32 32, 32
      %1658 = vsyncadd [#allocation3], %s1657
      %s1660 = sshll.u32 [#allocation2], 4
      %s1661 = int_to_ptr.vmem [resolvable:$true] %s1660
      %1663 = dma.vmem_to_hbm [thread:$0]  %s1661, 32, %s5, [#allocation3]
    $region25: #{prediction_model_forward.1} parent=1 // pred_fallthru
      _
    // Predicated region
    $region26: #{prediction_model_forward.1} parent=1 // pred_check
      _
    $region27: #{prediction_model_forward.1} parent=1 // pred_check_branch
      %1665 = sbr.rel (0) target = $region29
    $region28: #{prediction_model_forward.1} parent=1 // pred_region
      %1666 = dma.done [#allocation3], 32
    $region29: #{prediction_model_forward.1} parent=1 // pred_fallthru
      _
    %1667 = vsyncpa [#allocation3], 1

</llo_original>
